<compile_context>
chip_gen: v5e
topology: v5e:2x2
jax: 0.10.0
libtpu: 0.0.40
codegen_flags: <defaults>
</compile_context>

<pallas_src>
import functools

import jax
import jax.numpy as jnp
from jax import lax
from jax.experimental import pallas as pl
from jax.experimental.pallas import tpu as pltpu

LN_EPS = 1e-5
P = 4            # dim_scale
PP = P * P       # 16


def _final_patch_expand_kernel(x_ref, w_ref, e_ref, s_ref, g_ref, b_ref, o_ref):
    """One (batch, H-row-tile) block per grid step.

    x_ref : (1, TH, W, dim)          input tokens, (B, H, W, dim) layout
    w_ref : (dim, 16*dim)            pre-transposed expand weight
    e_ref : (16*dim, 16)             chunk-mean matrix (1/dim inside chunk j)
    s_ref : (16, 16*dim)             chunk-broadcast matrix (1.0 inside chunk j)
    g_ref : (1, 16*dim)              LayerNorm gamma, tiled 16x
    b_ref : (1, 16*dim)              LayerNorm beta,  tiled 16x
    o_ref : (1, TH, 4, W, 4*dim)     output in (B, H, p1, W, p2*dim) layout
    """
    w_t = w_ref[...]
    e = e_ref[...]
    s = s_ref[...]
    gamma = g_ref[...]            # hoisted out of the unrolled loops
    beta = b_ref[...]

    th = x_ref.shape[1]
    slab = P * x_ref.shape[3]     # 4*dim: lane width of one p1 slab

    for t in range(th):                                    # static unroll (TH <= 8)
        xt = x_ref[0, t]                                   # (W, dim)

        # Expand on the MXU with f32 accumulation.
        y = jnp.dot(xt, w_t, preferred_element_type=jnp.float32)          # (W, 16*dim)

        # Per-chunk LayerNorm; chunk stats via constant matmuls keeps the whole
        # path lane-dense (no per-chunk slicing, no concatenate).
        mu_b = jnp.dot(jnp.dot(y, e, preferred_element_type=jnp.float32), s,
                       preferred_element_type=jnp.float32)                # (W, 16*dim)
        cen = y - mu_b
        var = jnp.dot(cen * cen, e, preferred_element_type=jnp.float32)   # (W, 16)
        r_b = jnp.dot(lax.rsqrt(var + LN_EPS), s,
                      preferred_element_type=jnp.float32)                 # (W, 16*dim)
        out_t = (cen * r_b * gamma + beta).astype(o_ref.dtype)            # (W, 16*dim)

        # Scatter the 4 contiguous, lane-aligned p1-slabs straight into the
        # rearranged output layout.
        for p1 in range(P):
            o_ref[0, t, p1, :, :] = out_t[:, p1 * slab:(p1 + 1) * slab]


def _pick_h_tile(H, W, dim, itemsize, max_unroll=8, target_bytes=4 << 20):
    """Rows of H per grid step: ~4 MB output tiles with a small static unroll."""
    bytes_per_row = PP * W * dim * itemsize          # output bytes per H-row
    th = int(max(1, min(max_unroll, H, target_bytes // max(bytes_per_row, 1))))
    while H % th:
        th -= 1
    return th


@functools.partial(jax.jit, static_argnames=("H", "W"))
def final_patch_expand_x4(x, w_expand, gamma, beta, *, H, W):
    """x: (B, H*W, dim) -> (B, 16*H*W, dim)   (FinalPatchExpand_X4 forward)."""
    B, L, dim = x.shape
    assert L == H * W, "input feature has wrong size"
    out_ch = PP * dim                                 # 16*dim

    # Pre-transpose the Linear weight once (PyTorch (out,in) -> (in,out)):
    # no w.T inside the kernel.
    w_t = jnp.transpose(w_expand).astype(x.dtype)     # (dim, 16*dim)

    # Chunk-indicator matrices for the fused per-chunk LayerNorm.
    col_chunk = jnp.arange(out_ch, dtype=jnp.int32) // dim         # (16*dim,)
    chunk_ids = jnp.arange(PP, dtype=jnp.int32)                    # (16,)
    e_mat = (col_chunk[:, None] == chunk_ids[None, :]).astype(jnp.float32) / dim
    s_mat = (chunk_ids[:, None] == col_chunk[None, :]).astype(jnp.float32)

    g_t = jnp.tile(gamma.astype(jnp.float32), PP)[None, :]         # (1, 16*dim)
    b_t = jnp.tile(beta.astype(jnp.float32), PP)[None, :]          # (1, 16*dim)

    x4 = x.reshape(B, H, W, dim)                      # contiguous, free

    TH = _pick_h_tile(H, W, dim, jnp.dtype(x.dtype).itemsize)
    grid = (B, H // TH)

    out5 = pl.pallas_call(
        _final_patch_expand_kernel,
        out_shape=jax.ShapeDtypeStruct((B, H, P, W, P * dim), x.dtype),
        grid_spec=pltpu.PrefetchScalarGridSpec(
            num_scalar_prefetch=0,
            grid=grid,
            in_specs=[
                pl.BlockSpec((1, TH, W, dim), lambda b, h: (b, h, 0, 0)),
                pl.BlockSpec((dim, out_ch), lambda b, h: (0, 0)),
                pl.BlockSpec((out_ch, PP), lambda b, h: (0, 0)),
                pl.BlockSpec((PP, out_ch), lambda b, h: (0, 0)),
                pl.BlockSpec((1, out_ch), lambda b, h: (0, 0)),
                pl.BlockSpec((1, out_ch), lambda b, h: (0, 0)),
            ],
            out_specs=pl.BlockSpec((1, TH, P, W, P * dim),
                                   lambda b, h: (b, h, 0, 0, 0)),
        ),
        compiler_params=pltpu.CompilerParams(
            dimension_semantics=("parallel", "parallel"),
            vmem_limit_bytes=64 * 1024 * 1024,
        ),
    )(x4, w_t, e_mat, s_mat, g_t, b_t)

    # (B, H, 4, W, 4*dim) row-major is exactly (B, (h p1), (w p2), dim) row-major:
    # the final rearrange is a free contiguous reshape (no transpose pass).
    return out5.reshape(B, PP * H * W, dim)


def _reference(x, w_expand, gamma, beta, H, W):
    """Pure-JAX reference mirroring the PyTorch forward."""
    B, L, dim = x.shape
    y = jnp.einsum("blc,oc->blo", x, w_expand)                    # (B, L, 16*dim)
    y = y.reshape(B, H, W, P, P, dim)
    y = jnp.transpose(y, (0, 1, 3, 2, 4, 5)).reshape(B, PP * H * W, dim)
    mu = jnp.mean(y, axis=-1, keepdims=True)
    var = jnp.mean((y - mu) ** 2, axis=-1, keepdims=True)
    return (y - mu) / jnp.sqrt(var + LN_EPS) * gamma + beta


if __name__ == "__main__":
    # Small shapes consistent with the module: B=2, H=W=4 -> L=16, dim=32.
    B, H, W, dim = 2, 4, 4, 32
    L = H * W

    key = jax.random.PRNGKey(0)
    kx, kw = jax.random.split(key)

    x = jax.random.normal(kx, (B, L, dim), dtype=jnp.float32)
    # Linear(dim, 16*dim, bias=False) weight, PyTorch layout (out, in).
    w_expand = (jax.random.normal(kw, (PP * dim, dim), dtype=jnp.float32)
                * (1.0 / jnp.sqrt(dim)))
    # LayerNorm(dim) default init: gamma=1, beta=0.
    gamma = jnp.ones((dim,), dtype=jnp.float32)
    beta = jnp.zeros((dim,), dtype=jnp.float32)

    out = final_patch_expand_x4(x, w_expand, gamma, beta, H=H, W=W)
    out = jax.block_until_ready(out)

    ref = _reference(x, w_expand, gamma, beta, H, W)
    assert out.shape == (B, PP * L, dim), out.shape
    assert jnp.allclose(out, ref, atol=1e-4, rtol=1e-4), float(
        jnp.max(jnp.abs(out - ref)))

    print("KERNEL_OK")
</pallas_src>

<mosaic_0001>
module attributes {stable_mosaic.version = 11 : i64} {
  func.func @_final_patch_expand_kernel(%arg0: i32, %arg1: i32, %arg2: memref<1x4x4x32xf32, #tpu.memory_space<vmem>>, %arg3: memref<32x512xf32, #tpu.memory_space<vmem>>, %arg4: memref<512x16xf32, #tpu.memory_space<vmem>>, %arg5: memref<16x512xf32, #tpu.memory_space<vmem>>, %arg6: memref<1x512xf32, #tpu.memory_space<vmem>>, %arg7: memref<1x512xf32, #tpu.memory_space<vmem>>, %arg8: memref<1x4x4x4x128xf32, #tpu.memory_space<vmem>>) attributes {dimension_semantics = [#tpu.dimension_semantics<parallel>, #tpu.dimension_semantics<parallel>], iteration_bounds = array<i64: 2, 1>, scalar_prefetch = 0 : i64, scratch_operands = 0 : i64, tpu.core_type = #tpu.core_type<tc>, window_params = [{transform_indices = @transform_0, window_bounds = array<i64: 1, 4, 4, 32>}, {pipeline_mode = #tpu.pipeline_mode<synchronous>, transform_indices = @transform_1, window_bounds = array<i64: 32, 512>}, {pipeline_mode = #tpu.pipeline_mode<synchronous>, transform_indices = @transform_2, window_bounds = array<i64: 512, 16>}, {pipeline_mode = #tpu.pipeline_mode<synchronous>, transform_indices = @transform_3, window_bounds = array<i64: 16, 512>}, {pipeline_mode = #tpu.pipeline_mode<synchronous>, transform_indices = @transform_4, window_bounds = array<i64: 1, 512>}, {pipeline_mode = #tpu.pipeline_mode<synchronous>, transform_indices = @transform_5, window_bounds = array<i64: 1, 512>}, {transform_indices = @transform_6, window_bounds = array<i64: 1, 4, 4, 4, 128>}]} {
    %c0 = arith.constant 0 : index
    %c0_0 = arith.constant 0 : index
    %0 = vector.load %arg3[%c0, %c0_0] : memref<32x512xf32, #tpu.memory_space<vmem>>, vector<32x512xf32>
    %c0_1 = arith.constant 0 : index
    %c0_2 = arith.constant 0 : index
    %1 = vector.load %arg4[%c0_1, %c0_2] : memref<512x16xf32, #tpu.memory_space<vmem>>, vector<512x16xf32>
    %c0_3 = arith.constant 0 : index
    %c0_4 = arith.constant 0 : index
    %2 = vector.load %arg5[%c0_3, %c0_4] : memref<16x512xf32, #tpu.memory_space<vmem>>, vector<16x512xf32>
    %c0_5 = arith.constant 0 : index
    %c0_6 = arith.constant 0 : index
    %3 = vector.load %arg6[%c0_5, %c0_6] : memref<1x512xf32, #tpu.memory_space<vmem>>, vector<1x512xf32>
    %c0_7 = arith.constant 0 : index
    %c0_8 = arith.constant 0 : index
    %4 = vector.load %arg7[%c0_7, %c0_8] : memref<1x512xf32, #tpu.memory_space<vmem>>, vector<1x512xf32>
    %c0_9 = arith.constant 0 : index
    %c0_10 = arith.constant 0 : index
    %c0_11 = arith.constant 0 : index
    %c0_12 = arith.constant 0 : index
    %5 = vector.load %arg2[%c0_9, %c0_10, %c0_11, %c0_12] : memref<1x4x4x32xf32, #tpu.memory_space<vmem>>, vector<1x1x4x32xf32>
    %6 = vector.shape_cast %5 : vector<1x1x4x32xf32> to vector<4x32xf32>
    %cst = arith.constant dense<0.000000e+00> : vector<4x512xf32>
    %7 = tpu.matmul %6, %0, %cst {dimension_numbers = #tpu.dot_dimension_numbers<[1], [0], [0], [1], [0, 0, 1, 1], [], []>} : vector<4x32xf32>, vector<32x512xf32>, vector<4x512xf32> -> vector<4x512xf32>
    %cst_13 = arith.constant dense<0.000000e+00> : vector<4x16xf32>
    %8 = tpu.matmul %7, %1, %cst_13 {dimension_numbers = #tpu.dot_dimension_numbers<[1], [0], [0], [1], [0, 0, 1, 1], [], []>} : vector<4x512xf32>, vector<512x16xf32>, vector<4x16xf32> -> vector<4x16xf32>
    %cst_14 = arith.constant dense<0.000000e+00> : vector<4x512xf32>
    %9 = tpu.matmul %8, %2, %cst_14 {dimension_numbers = #tpu.dot_dimension_numbers<[1], [0], [0], [1], [0, 0, 1, 1], [], []>} : vector<4x16xf32>, vector<16x512xf32>, vector<4x512xf32> -> vector<4x512xf32>
    %10 = arith.subf %7, %9 : vector<4x512xf32>
    %11 = arith.mulf %10, %10 : vector<4x512xf32>
    %cst_15 = arith.constant dense<0.000000e+00> : vector<4x16xf32>
    %12 = tpu.matmul %11, %1, %cst_15 {dimension_numbers = #tpu.dot_dimension_numbers<[1], [0], [0], [1], [0, 0, 1, 1], [], []>} : vector<4x512xf32>, vector<512x16xf32>, vector<4x16xf32> -> vector<4x16xf32>
    %cst_16 = arith.constant 9.99999974E-6 : f32
    %13 = vector.broadcast %cst_16 : f32 to vector<4x16xf32>
    %14 = arith.addf %12, %13 : vector<4x16xf32>
    %15 = math.rsqrt %14 : vector<4x16xf32>
    %cst_17 = arith.constant dense<0.000000e+00> : vector<4x512xf32>
    %16 = tpu.matmul %15, %2, %cst_17 {dimension_numbers = #tpu.dot_dimension_numbers<[1], [0], [0], [1], [0, 0, 1, 1], [], []>} : vector<4x16xf32>, vector<16x512xf32>, vector<4x512xf32> -> vector<4x512xf32>
    %17 = arith.mulf %10, %16 : vector<4x512xf32>
    %18 = vector.broadcast %3 : vector<1x512xf32> to vector<4x512xf32>
    %19 = arith.mulf %17, %18 : vector<4x512xf32>
    %20 = vector.broadcast %4 : vector<1x512xf32> to vector<4x512xf32>
    %21 = arith.addf %19, %20 : vector<4x512xf32>
    %22 = vector.extract_strided_slice %21 {offsets = [0, 0], sizes = [4, 128], strides = [1, 1]} : vector<4x512xf32> to vector<4x128xf32>
    %c0_18 = arith.constant 0 : index
    %c0_19 = arith.constant 0 : index
    %c0_20 = arith.constant 0 : index
    %c0_21 = arith.constant 0 : index
    %c0_22 = arith.constant 0 : index
    %23 = vector.load %arg8[%c0_18, %c0_19, %c0_20, %c0_21, %c0_22] : memref<1x4x4x4x128xf32, #tpu.memory_space<vmem>>, vector<1x1x1x4x128xf32>
    %24 = vector.shape_cast %23 : vector<1x1x1x4x128xf32> to vector<4x128xf32>
    %25 = vector.shape_cast %22 : vector<4x128xf32> to vector<1x1x1x4x128xf32>
    tpu.vector_store %arg8[%c0_18, %c0_19, %c0_20, %c0_21, %c0_22], %25 {strides = array<i32>} : memref<1x4x4x4x128xf32, #tpu.memory_space<vmem>>, vector<1x1x1x4x128xf32>,
    %26 = vector.extract_strided_slice %21 {offsets = [0, 128], sizes = [4, 128], strides = [1, 1]} : vector<4x512xf32> to vector<4x128xf32>
    %c0_23 = arith.constant 0 : index
    %c0_24 = arith.constant 0 : index
    %c1 = arith.constant 1 : index
    %c0_25 = arith.constant 0 : index
    %c0_26 = arith.constant 0 : index
    %27 = vector.load %arg8[%c0_23, %c0_24, %c1, %c0_25, %c0_26] : memref<1x4x4x4x128xf32, #tpu.memory_space<vmem>>, vector<1x1x1x4x128xf32>
    %28 = vector.shape_cast %27 : vector<1x1x1x4x128xf32> to vector<4x128xf32>
    %29 = vector.shape_cast %26 : vector<4x128xf32> to vector<1x1x1x4x128xf32>
    tpu.vector_store %arg8[%c0_23, %c0_24, %c1, %c0_25, %c0_26], %29 {strides = array<i32>} : memref<1x4x4x4x128xf32, #tpu.memory_space<vmem>>, vector<1x1x1x4x128xf32>,
    %30 = vector.extract_strided_slice %21 {offsets = [0, 256], sizes = [4, 128], strides = [1, 1]} : vector<4x512xf32> to vector<4x128xf32>
    %c0_27 = arith.constant 0 : index
    %c0_28 = arith.constant 0 : index
    %c2 = arith.constant 2 : index
    %c0_29 = arith.constant 0 : index
    %c0_30 = arith.constant 0 : index
    %31 = vector.load %arg8[%c0_27, %c0_28, %c2, %c0_29, %c0_30] : memref<1x4x4x4x128xf32, #tpu.memory_space<vmem>>, vector<1x1x1x4x128xf32>
    %32 = vector.shape_cast %31 : vector<1x1x1x4x128xf32> to vector<4x128xf32>
    %33 = vector.shape_cast %30 : vector<4x128xf32> to vector<1x1x1x4x128xf32>
    tpu.vector_store %arg8[%c0_27, %c0_28, %c2, %c0_29, %c0_30], %33 {strides = array<i32>} : memref<1x4x4x4x128xf32, #tpu.memory_space<vmem>>, vector<1x1x1x4x128xf32>,
    %34 = vector.extract_strided_slice %21 {offsets = [0, 384], sizes = [4, 128], strides = [1, 1]} : vector<4x512xf32> to vector<4x128xf32>
    %c0_31 = arith.constant 0 : index
    %c0_32 = arith.constant 0 : index
    %c3 = arith.constant 3 : index
    %c0_33 = arith.constant 0 : index
    %c0_34 = arith.constant 0 : index
    %35 = vector.load %arg8[%c0_31, %c0_32, %c3, %c0_33, %c0_34] : memref<1x4x4x4x128xf32, #tpu.memory_space<vmem>>, vector<1x1x1x4x128xf32>
    %36 = vector.shape_cast %35 : vector<1x1x1x4x128xf32> to vector<4x128xf32>
    %37 = vector.shape_cast %34 : vector<4x128xf32> to vector<1x1x1x4x128xf32>
    tpu.vector_store %arg8[%c0_31, %c0_32, %c3, %c0_33, %c0_34], %37 {strides = array<i32>} : memref<1x4x4x4x128xf32, #tpu.memory_space<vmem>>, vector<1x1x1x4x128xf32>,
    %c0_35 = arith.constant 0 : index
    %c1_36 = arith.constant 1 : index
    %c0_37 = arith.constant 0 : index
    %c0_38 = arith.constant 0 : index
    %38 = vector.load %arg2[%c0_35, %c1_36, %c0_37, %c0_38] : memref<1x4x4x32xf32, #tpu.memory_space<vmem>>, vector<1x1x4x32xf32>
    %39 = vector.shape_cast %38 : vector<1x1x4x32xf32> to vector<4x32xf32>
    %cst_39 = arith.constant dense<0.000000e+00> : vector<4x512xf32>
    %40 = tpu.matmul %39, %0, %cst_39 {dimension_numbers = #tpu.dot_dimension_numbers<[1], [0], [0], [1], [0, 0, 1, 1], [], []>} : vector<4x32xf32>, vector<32x512xf32>, vector<4x512xf32> -> vector<4x512xf32>
    %cst_40 = arith.constant dense<0.000000e+00> : vector<4x16xf32>
    %41 = tpu.matmul %40, %1, %cst_40 {dimension_numbers = #tpu.dot_dimension_numbers<[1], [0], [0], [1], [0, 0, 1, 1], [], []>} : vector<4x512xf32>, vector<512x16xf32>, vector<4x16xf32> -> vector<4x16xf32>
    %cst_41 = arith.constant dense<0.000000e+00> : vector<4x512xf32>
    %42 = tpu.matmul %41, %2, %cst_41 {dimension_numbers = #tpu.dot_dimension_numbers<[1], [0], [0], [1], [0, 0, 1, 1], [], []>} : vector<4x16xf32>, vector<16x512xf32>, vector<4x512xf32> -> vector<4x512xf32>
    %43 = arith.subf %40, %42 : vector<4x512xf32>
    %44 = arith.mulf %43, %43 : vector<4x512xf32>
    %cst_42 = arith.constant dense<0.000000e+00> : vector<4x16xf32>
    %45 = tpu.matmul %44, %1, %cst_42 {dimension_numbers = #tpu.dot_dimension_numbers<[1], [0], [0], [1], [0, 0, 1, 1], [], []>} : vector<4x512xf32>, vector<512x16xf32>, vector<4x16xf32> -> vector<4x16xf32>
    %cst_43 = arith.constant 9.99999974E-6 : f32
    %46 = vector.broadcast %cst_43 : f32 to vector<4x16xf32>
    %47 = arith.addf %45, %46 : vector<4x16xf32>
    %48 = math.rsqrt %47 : vector<4x16xf32>
    %cst_44 = arith.constant dense<0.000000e+00> : vector<4x512xf32>
    %49 = tpu.matmul %48, %2, %cst_44 {dimension_numbers = #tpu.dot_dimension_numbers<[1], [0], [0], [1], [0, 0, 1, 1], [], []>} : vector<4x16xf32>, vector<16x512xf32>, vector<4x512xf32> -> vector<4x512xf32>
    %50 = arith.mulf %43, %49 : vector<4x512xf32>
    %51 = vector.broadcast %3 : vector<1x512xf32> to vector<4x512xf32>
    %52 = arith.mulf %50, %51 : vector<4x512xf32>
    %53 = vector.broadcast %4 : vector<1x512xf32> to vector<4x512xf32>
    %54 = arith.addf %52, %53 : vector<4x512xf32>
    %55 = vector.extract_strided_slice %54 {offsets = [0, 0], sizes = [4, 128], strides = [1, 1]} : vector<4x512xf32> to vector<4x128xf32>
    %c0_45 = arith.constant 0 : index
    %c1_46 = arith.constant 1 : index
    %c0_47 = arith.constant 0 : index
    %c0_48 = arith.constant 0 : index
    %c0_49 = arith.constant 0 : index
    %56 = vector.load %arg8[%c0_45, %c1_46, %c0_47, %c0_48, %c0_49] : memref<1x4x4x4x128xf32, #tpu.memory_space<vmem>>, vector<1x1x1x4x128xf32>
    %57 = vector.shape_cast %56 : vector<1x1x1x4x128xf32> to vector<4x128xf32>
    %58 = vector.shape_cast %55 : vector<4x128xf32> to vector<1x1x1x4x128xf32>
    tpu.vector_store %arg8[%c0_45, %c1_46, %c0_47, %c0_48, %c0_49], %58 {strides = array<i32>} : memref<1x4x4x4x128xf32, #tpu.memory_space<vmem>>, vector<1x1x1x4x128xf32>,
    %59 = vector.extract_strided_slice %54 {offsets = [0, 128], sizes = [4, 128], strides = [1, 1]} : vector<4x512xf32> to vector<4x128xf32>
    %c0_50 = arith.constant 0 : index
    %c1_51 = arith.constant 1 : index
    %c1_52 = arith.constant 1 : index
    %c0_53 = arith.constant 0 : index
    %c0_54 = arith.constant 0 : index
    %60 = vector.load %arg8[%c0_50, %c1_51, %c1_52, %c0_53, %c0_54] : memref<1x4x4x4x128xf32, #tpu.memory_space<vmem>>, vector<1x1x1x4x128xf32>
    %61 = vector.shape_cast %60 : vector<1x1x1x4x128xf32> to vector<4x128xf32>
    %62 = vector.shape_cast %59 : vector<4x128xf32> to vector<1x1x1x4x128xf32>
    tpu.vector_store %arg8[%c0_50, %c1_51, %c1_52, %c0_53, %c0_54], %62 {strides = array<i32>} : memref<1x4x4x4x128xf32, #tpu.memory_space<vmem>>, vector<1x1x1x4x128xf32>,
    %63 = vector.extract_strided_slice %54 {offsets = [0, 256], sizes = [4, 128], strides = [1, 1]} : vector<4x512xf32> to vector<4x128xf32>
    %c0_55 = arith.constant 0 : index
    %c1_56 = arith.constant 1 : index
    %c2_57 = arith.constant 2 : index
    %c0_58 = arith.constant 0 : index
    %c0_59 = arith.constant 0 : index
    %64 = vector.load %arg8[%c0_55, %c1_56, %c2_57, %c0_58, %c0_59] : memref<1x4x4x4x128xf32, #tpu.memory_space<vmem>>, vector<1x1x1x4x128xf32>
    %65 = vector.shape_cast %64 : vector<1x1x1x4x128xf32> to vector<4x128xf32>
    %66 = vector.shape_cast %63 : vector<4x128xf32> to vector<1x1x1x4x128xf32>
    tpu.vector_store %arg8[%c0_55, %c1_56, %c2_57, %c0_58, %c0_59], %66 {strides = array<i32>} : memref<1x4x4x4x128xf32, #tpu.memory_space<vmem>>, vector<1x1x1x4x128xf32>,
    %67 = vector.extract_strided_slice %54 {offsets = [0, 384], sizes = [4, 128], strides = [1, 1]} : vector<4x512xf32> to vector<4x128xf32>
    %c0_60 = arith.constant 0 : index
    %c1_61 = arith.constant 1 : index
    %c3_62 = arith.constant 3 : index
    %c0_63 = arith.constant 0 : index
    %c0_64 = arith.constant 0 : index
    %68 = vector.load %arg8[%c0_60, %c1_61, %c3_62, %c0_63, %c0_64] : memref<1x4x4x4x128xf32, #tpu.memory_space<vmem>>, vector<1x1x1x4x128xf32>
    %69 = vector.shape_cast %68 : vector<1x1x1x4x128xf32> to vector<4x128xf32>
    %70 = vector.shape_cast %67 : vector<4x128xf32> to vector<1x1x1x4x128xf32>
    tpu.vector_store %arg8[%c0_60, %c1_61, %c3_62, %c0_63, %c0_64], %70 {strides = array<i32>} : memref<1x4x4x4x128xf32, #tpu.memory_space<vmem>>, vector<1x1x1x4x128xf32>,
    %c0_65 = arith.constant 0 : index
    %c2_66 = arith.constant 2 : index
    %c0_67 = arith.constant 0 : index
    %c0_68 = arith.constant 0 : index
    %71 = vector.load %arg2[%c0_65, %c2_66, %c0_67, %c0_68] : memref<1x4x4x32xf32, #tpu.memory_space<vmem>>, vector<1x1x4x32xf32>
    %72 = vector.shape_cast %71 : vector<1x1x4x32xf32> to vector<4x32xf32>
    %cst_69 = arith.constant dense<0.000000e+00> : vector<4x512xf32>
    %73 = tpu.matmul %72, %0, %cst_69 {dimension_numbers = #tpu.dot_dimension_numbers<[1], [0], [0], [1], [0, 0, 1, 1], [], []>} : vector<4x32xf32>, vector<32x512xf32>, vector<4x512xf32> -> vector<4x512xf32>
    %cst_70 = arith.constant dense<0.000000e+00> : vector<4x16xf32>
    %74 = tpu.matmul %73, %1, %cst_70 {dimension_numbers = #tpu.dot_dimension_numbers<[1], [0], [0], [1], [0, 0, 1, 1], [], []>} : vector<4x512xf32>, vector<512x16xf32>, vector<4x16xf32> -> vector<4x16xf32>
    %cst_71 = arith.constant dense<0.000000e+00> : vector<4x512xf32>
    %75 = tpu.matmul %74, %2, %cst_71 {dimension_numbers = #tpu.dot_dimension_numbers<[1], [0], [0], [1], [0, 0, 1, 1], [], []>} : vector<4x16xf32>, vector<16x512xf32>, vector<4x512xf32> -> vector<4x512xf32>
    %76 = arith.subf %73, %75 : vector<4x512xf32>
    %77 = arith.mulf %76, %76 : vector<4x512xf32>
    %cst_72 = arith.constant dense<0.000000e+00> : vector<4x16xf32>
    %78 = tpu.matmul %77, %1, %cst_72 {dimension_numbers = #tpu.dot_dimension_numbers<[1], [0], [0], [1], [0, 0, 1, 1], [], []>} : vector<4x512xf32>, vector<512x16xf32>, vector<4x16xf32> -> vector<4x16xf32>
    %cst_73 = arith.constant 9.99999974E-6 : f32
    %79 = vector.broadcast %cst_73 : f32 to vector<4x16xf32>
    %80 = arith.addf %78, %79 : vector<4x16xf32>
    %81 = math.rsqrt %80 : vector<4x16xf32>
    %cst_74 = arith.constant dense<0.000000e+00> : vector<4x512xf32>
    %82 = tpu.matmul %81, %2, %cst_74 {dimension_numbers = #tpu.dot_dimension_numbers<[1], [0], [0], [1], [0, 0, 1, 1], [], []>} : vector<4x16xf32>, vector<16x512xf32>, vector<4x512xf32> -> vector<4x512xf32>
    %83 = arith.mulf %76, %82 : vector<4x512xf32>
    %84 = vector.broadcast %3 : vector<1x512xf32> to vector<4x512xf32>
    %85 = arith.mulf %83, %84 : vector<4x512xf32>
    %86 = vector.broadcast %4 : vector<1x512xf32> to vector<4x512xf32>
    %87 = arith.addf %85, %86 : vector<4x512xf32>
    %88 = vector.extract_strided_slice %87 {offsets = [0, 0], sizes = [4, 128], strides = [1, 1]} : vector<4x512xf32> to vector<4x128xf32>
    %c0_75 = arith.constant 0 : index
    %c2_76 = arith.constant 2 : index
    %c0_77 = arith.constant 0 : index
    %c0_78 = arith.constant 0 : index
    %c0_79 = arith.constant 0 : index
    %89 = vector.load %arg8[%c0_75, %c2_76, %c0_77, %c0_78, %c0_79] : memref<1x4x4x4x128xf32, #tpu.memory_space<vmem>>, vector<1x1x1x4x128xf32>
    %90 = vector.shape_cast %89 : vector<1x1x1x4x128xf32> to vector<4x128xf32>
    %91 = vector.shape_cast %88 : vector<4x128xf32> to vector<1x1x1x4x128xf32>
    tpu.vector_store %arg8[%c0_75, %c2_76, %c0_77, %c0_78, %c0_79], %91 {strides = array<i32>} : memref<1x4x4x4x128xf32, #tpu.memory_space<vmem>>, vector<1x1x1x4x128xf32>,
    %92 = vector.extract_strided_slice %87 {offsets = [0, 128], sizes = [4, 128], strides = [1, 1]} : vector<4x512xf32> to vector<4x128xf32>
    %c0_80 = arith.constant 0 : index
    %c2_81 = arith.constant 2 : index
    %c1_82 = arith.constant 1 : index
    %c0_83 = arith.constant 0 : index
    %c0_84 = arith.constant 0 : index
    %93 = vector.load %arg8[%c0_80, %c2_81, %c1_82, %c0_83, %c0_84] : memref<1x4x4x4x128xf32, #tpu.memory_space<vmem>>, vector<1x1x1x4x128xf32>
    %94 = vector.shape_cast %93 : vector<1x1x1x4x128xf32> to vector<4x128xf32>
    %95 = vector.shape_cast %92 : vector<4x128xf32> to vector<1x1x1x4x128xf32>
    tpu.vector_store %arg8[%c0_80, %c2_81, %c1_82, %c0_83, %c0_84], %95 {strides = array<i32>} : memref<1x4x4x4x128xf32, #tpu.memory_space<vmem>>, vector<1x1x1x4x128xf32>,
    %96 = vector.extract_strided_slice %87 {offsets = [0, 256], sizes = [4, 128], strides = [1, 1]} : vector<4x512xf32> to vector<4x128xf32>
    %c0_85 = arith.constant 0 : index
    %c2_86 = arith.constant 2 : index
    %c2_87 = arith.constant 2 : index
    %c0_88 = arith.constant 0 : index
    %c0_89 = arith.constant 0 : index
    %97 = vector.load %arg8[%c0_85, %c2_86, %c2_87, %c0_88, %c0_89] : memref<1x4x4x4x128xf32, #tpu.memory_space<vmem>>, vector<1x1x1x4x128xf32>
    %98 = vector.shape_cast %97 : vector<1x1x1x4x128xf32> to vector<4x128xf32>
    %99 = vector.shape_cast %96 : vector<4x128xf32> to vector<1x1x1x4x128xf32>
    tpu.vector_store %arg8[%c0_85, %c2_86, %c2_87, %c0_88, %c0_89], %99 {strides = array<i32>} : memref<1x4x4x4x128xf32, #tpu.memory_space<vmem>>, vector<1x1x1x4x128xf32>,
    %100 = vector.extract_strided_slice %87 {offsets = [0, 384], sizes = [4, 128], strides = [1, 1]} : vector<4x512xf32> to vector<4x128xf32>
    %c0_90 = arith.constant 0 : index
    %c2_91 = arith.constant 2 : index
    %c3_92 = arith.constant 3 : index
    %c0_93 = arith.constant 0 : index
    %c0_94 = arith.constant 0 : index
    %101 = vector.load %arg8[%c0_90, %c2_91, %c3_92, %c0_93, %c0_94] : memref<1x4x4x4x128xf32, #tpu.memory_space<vmem>>, vector<1x1x1x4x128xf32>
    %102 = vector.shape_cast %101 : vector<1x1x1x4x128xf32> to vector<4x128xf32>
    %103 = vector.shape_cast %100 : vector<4x128xf32> to vector<1x1x1x4x128xf32>
    tpu.vector_store %arg8[%c0_90, %c2_91, %c3_92, %c0_93, %c0_94], %103 {strides = array<i32>} : memref<1x4x4x4x128xf32, #tpu.memory_space<vmem>>, vector<1x1x1x4x128xf32>,
    %c0_95 = arith.constant 0 : index
    %c3_96 = arith.constant 3 : index
    %c0_97 = arith.constant 0 : index
    %c0_98 = arith.constant 0 : index
    %104 = vector.load %arg2[%c0_95, %c3_96, %c0_97, %c0_98] : memref<1x4x4x32xf32, #tpu.memory_space<vmem>>, vector<1x1x4x32xf32>
    %105 = vector.shape_cast %104 : vector<1x1x4x32xf32> to vector<4x32xf32>
    %cst_99 = arith.constant dense<0.000000e+00> : vector<4x512xf32>
    %106 = tpu.matmul %105, %0, %cst_99 {dimension_numbers = #tpu.dot_dimension_numbers<[1], [0], [0], [1], [0, 0, 1, 1], [], []>} : vector<4x32xf32>, vector<32x512xf32>, vector<4x512xf32> -> vector<4x512xf32>
    %cst_100 = arith.constant dense<0.000000e+00> : vector<4x16xf32>
    %107 = tpu.matmul %106, %1, %cst_100 {dimension_numbers = #tpu.dot_dimension_numbers<[1], [0], [0], [1], [0, 0, 1, 1], [], []>} : vector<4x512xf32>, vector<512x16xf32>, vector<4x16xf32> -> vector<4x16xf32>
    %cst_101 = arith.constant dense<0.000000e+00> : vector<4x512xf32>
    %108 = tpu.matmul %107, %2, %cst_101 {dimension_numbers = #tpu.dot_dimension_numbers<[1], [0], [0], [1], [0, 0, 1, 1], [], []>} : vector<4x16xf32>, vector<16x512xf32>, vector<4x512xf32> -> vector<4x512xf32>
    %109 = arith.subf %106, %108 : vector<4x512xf32>
    %110 = arith.mulf %109, %109 : vector<4x512xf32>
    %cst_102 = arith.constant dense<0.000000e+00> : vector<4x16xf32>
    %111 = tpu.matmul %110, %1, %cst_102 {dimension_numbers = #tpu.dot_dimension_numbers<[1], [0], [0], [1], [0, 0, 1, 1], [], []>} : vector<4x512xf32>, vector<512x16xf32>, vector<4x16xf32> -> vector<4x16xf32>
    %cst_103 = arith.constant 9.99999974E-6 : f32
    %112 = vector.broadcast %cst_103 : f32 to vector<4x16xf32>
    %113 = arith.addf %111, %112 : vector<4x16xf32>
    %114 = math.rsqrt %113 : vector<4x16xf32>
    %cst_104 = arith.constant dense<0.000000e+00> : vector<4x512xf32>
    %115 = tpu.matmul %114, %2, %cst_104 {dimension_numbers = #tpu.dot_dimension_numbers<[1], [0], [0], [1], [0, 0, 1, 1], [], []>} : vector<4x16xf32>, vector<16x512xf32>, vector<4x512xf32> -> vector<4x512xf32>
    %116 = arith.mulf %109, %115 : vector<4x512xf32>
    %117 = vector.broadcast %3 : vector<1x512xf32> to vector<4x512xf32>
    %118 = arith.mulf %116, %117 : vector<4x512xf32>
    %119 = vector.broadcast %4 : vector<1x512xf32> to vector<4x512xf32>
    %120 = arith.addf %118, %119 : vector<4x512xf32>
    %121 = vector.extract_strided_slice %120 {offsets = [0, 0], sizes = [4, 128], strides = [1, 1]} : vector<4x512xf32> to vector<4x128xf32>
    %c0_105 = arith.constant 0 : index
    %c3_106 = arith.constant 3 : index
    %c0_107 = arith.constant 0 : index
    %c0_108 = arith.constant 0 : index
    %c0_109 = arith.constant 0 : index
    %122 = vector.load %arg8[%c0_105, %c3_106, %c0_107, %c0_108, %c0_109] : memref<1x4x4x4x128xf32, #tpu.memory_space<vmem>>, vector<1x1x1x4x128xf32>
    %123 = vector.shape_cast %122 : vector<1x1x1x4x128xf32> to vector<4x128xf32>
    %124 = vector.shape_cast %121 : vector<4x128xf32> to vector<1x1x1x4x128xf32>
    tpu.vector_store %arg8[%c0_105, %c3_106, %c0_107, %c0_108, %c0_109], %124 {strides = array<i32>} : memref<1x4x4x4x128xf32, #tpu.memory_space<vmem>>, vector<1x1x1x4x128xf32>,
    %125 = vector.extract_strided_slice %120 {offsets = [0, 128], sizes = [4, 128], strides = [1, 1]} : vector<4x512xf32> to vector<4x128xf32>
    %c0_110 = arith.constant 0 : index
    %c3_111 = arith.constant 3 : index
    %c1_112 = arith.constant 1 : index
    %c0_113 = arith.constant 0 : index
    %c0_114 = arith.constant 0 : index
    %126 = vector.load %arg8[%c0_110, %c3_111, %c1_112, %c0_113, %c0_114] : memref<1x4x4x4x128xf32, #tpu.memory_space<vmem>>, vector<1x1x1x4x128xf32>
    %127 = vector.shape_cast %126 : vector<1x1x1x4x128xf32> to vector<4x128xf32>
    %128 = vector.shape_cast %125 : vector<4x128xf32> to vector<1x1x1x4x128xf32>
    tpu.vector_store %arg8[%c0_110, %c3_111, %c1_112, %c0_113, %c0_114], %128 {strides = array<i32>} : memref<1x4x4x4x128xf32, #tpu.memory_space<vmem>>, vector<1x1x1x4x128xf32>,
    %129 = vector.extract_strided_slice %120 {offsets = [0, 256], sizes = [4, 128], strides = [1, 1]} : vector<4x512xf32> to vector<4x128xf32>
    %c0_115 = arith.constant 0 : index
    %c3_116 = arith.constant 3 : index
    %c2_117 = arith.constant 2 : index
    %c0_118 = arith.constant 0 : index
    %c0_119 = arith.constant 0 : index
    %130 = vector.load %arg8[%c0_115, %c3_116, %c2_117, %c0_118, %c0_119] : memref<1x4x4x4x128xf32, #tpu.memory_space<vmem>>, vector<1x1x1x4x128xf32>
    %131 = vector.shape_cast %130 : vector<1x1x1x4x128xf32> to vector<4x128xf32>
    %132 = vector.shape_cast %129 : vector<4x128xf32> to vector<1x1x1x4x128xf32>
    tpu.vector_store %arg8[%c0_115, %c3_116, %c2_117, %c0_118, %c0_119], %132 {strides = array<i32>} : memref<1x4x4x4x128xf32, #tpu.memory_space<vmem>>, vector<1x1x1x4x128xf32>,
    %133 = vector.extract_strided_slice %120 {offsets = [0, 384], sizes = [4, 128], strides = [1, 1]} : vector<4x512xf32> to vector<4x128xf32>
    %c0_120 = arith.constant 0 : index
    %c3_121 = arith.constant 3 : index
    %c3_122 = arith.constant 3 : index
    %c0_123 = arith.constant 0 : index
    %c0_124 = arith.constant 0 : index
    %134 = vector.load %arg8[%c0_120, %c3_121, %c3_122, %c0_123, %c0_124] : memref<1x4x4x4x128xf32, #tpu.memory_space<vmem>>, vector<1x1x1x4x128xf32>
    %135 = vector.shape_cast %134 : vector<1x1x1x4x128xf32> to vector<4x128xf32>
    %136 = vector.shape_cast %133 : vector<4x128xf32> to vector<1x1x1x4x128xf32>
    tpu.vector_store %arg8[%c0_120, %c3_121, %c3_122, %c0_123, %c0_124], %136 {strides = array<i32>} : memref<1x4x4x4x128xf32, #tpu.memory_space<vmem>>, vector<1x1x1x4x128xf32>,
    return
  }
  func.func @transform_0(%arg0: i32, %arg1: i32) -> (i32, i32, i32, i32) {
    %c0_i32 = arith.constant 0 : i32
    %c0_i32_0 = arith.constant 0 : i32
    %c0_i32_1 = arith.constant 0 : i32
    return %arg0, %arg1, %c0_i32, %c0_i32_0 : i32, i32, i32, i32
  }
  func.func @transform_1(%arg0: i32, %arg1: i32) -> (i32, i32) {
    %c0_i32 = arith.constant 0 : i32
    %c0_i32_0 = arith.constant 0 : i32
    %c0_i32_1 = arith.constant 0 : i32
    return %c0_i32, %c0_i32_0 : i32, i32
  }
  func.func @transform_2(%arg0: i32, %arg1: i32) -> (i32, i32) {
    %c0_i32 = arith.constant 0 : i32
    %c0_i32_0 = arith.constant 0 : i32
    %c0_i32_1 = arith.constant 0 : i32
    return %c0_i32, %c0_i32_0 : i32, i32
  }
  func.func @transform_3(%arg0: i32, %arg1: i32) -> (i32, i32) {
    %c0_i32 = arith.constant 0 : i32
    %c0_i32_0 = arith.constant 0 : i32
    %c0_i32_1 = arith.constant 0 : i32
    return %c0_i32, %c0_i32_0 : i32, i32
  }
  func.func @transform_4(%arg0: i32, %arg1: i32) -> (i32, i32) {
    %c0_i32 = arith.constant 0 : i32
    %c0_i32_0 = arith.constant 0 : i32
    %c0_i32_1 = arith.constant 0 : i32
    return %c0_i32, %c0_i32_0 : i32, i32
  }
  func.func @transform_5(%arg0: i32, %arg1: i32) -> (i32, i32) {
    %c0_i32 = arith.constant 0 : i32
    %c0_i32_0 = arith.constant 0 : i32
    %c0_i32_1 = arith.constant 0 : i32
    return %c0_i32, %c0_i32_0 : i32, i32
  }
  func.func @transform_6(%arg0: i32, %arg1: i32) -> (i32, i32, i32, i32, i32) {
    %c0_i32 = arith.constant 0 : i32
    %c0_i32_0 = arith.constant 0 : i32
    %c0_i32_1 = arith.constant 0 : i32
    %c0_i32_2 = arith.constant 0 : i32
    return %arg0, %arg1, %c0_i32, %c0_i32_0, %c0_i32_1 : i32, i32, i32, i32, i32
  }
}

</mosaic_0001>

<llo_original>
// kernel: tile.13
$region0: #{tile.13}
  #allocation0 [shape = 's32[1]{0}', space=sflag, size = 0x4, scoped, tag = 'scoped memory for tile.13']
  %s0 = inlined_call_operand.vmem [shape: f32[32], index: 0, kind: input, shape index: {}]
  %s1 = inlined_call_operand.vmem [shape: f32[16,32], index: 1, kind: output, shape index: {}]
  // Predicated region
  $region2: #{tile.13} parent=0 // pred_check
    _
  $region3: #{tile.13} parent=0 // pred_check_branch
    %3 = sbr.rel (0) target = $region5
  $region4: #{tile.13} parent=0 // pred_region
    _
  $region5: #{tile.13} parent=0 // pred_fallthru
    _
  %v4 = vld [vmem:[%s0] ss:$0 sm:$0xff]
  %5 = vst [vmem:[%s1] sm:$0xff] %v4
  %s6 = scalar_lea.vmem %s1, 8
  %7 = vst [vmem:[%s6] sm:$0xff] %v4

// kernel: tile.14
$region0: #{tile.14}
  %s0 = inlined_call_operand.vmem [shape: f32[16,32], index: 0, kind: input, shape index: {}]
  %s1 = inlined_call_operand.vmem [shape: f32[1,512], index: 1, kind: output, shape index: {}]
  $region1: #{tile.14} parent=0
    #allocation0 [shape = 'u8[16384]{0}', space=vmem, size = 0x4000, scoped, tag = 'scoped mem for output reshape']
    %v2 = vld [vmem:[%s0] ss:$4 sm:$0xf]
    %vm3 = vcmask 261120
    %4 = vst.msk [vmem:[#allocation0] ss:$8 sm:$0xf] %vm3, %v2
    %s5 = scalar_lea.vmem %s0, 3
    %v6 = vld [vmem:[%s5] ss:$4 sm:$0xf]
    %7 = vrot.lane.b32.xlu0 %v6, 96
    %v8 = vpop.permute.xlu0 %7
    %vm9 = vcmask 1048320
    %10 = vst.msk [vmem:[#allocation0] ss:$8 sm:$0xf] %vm9, %v8
    %s11 = scalar_lea.vmem %s0, 2
    %v12 = vld [vmem:[%s11] ss:$4 sm:$0xf]
    %13 = vrot.lane.b32.xlu0 %v12, 64
    %v14 = vpop.permute.xlu0 %13
    %vm15 = vcmask 785920
    %16 = vst.msk [vmem:[#allocation0] ss:$8 sm:$0xf] %vm15, %v14
    %s17 = scalar_lea.vmem %s0, 1
    %v18 = vld [vmem:[%s17] ss:$4 sm:$0xf]
    %19 = vrot.lane.b32.xlu0 %v18, 32
    %v20 = vpop.permute.xlu0 %19
    %vm21 = vcmask 523520
    %22 = vst.msk [vmem:[#allocation0] ss:$8 sm:$0xf] %vm21, %v20
    %s24 = ssub.s32 2, 1
    %v25 = vld [vmem:[#allocation0] sm:%s24]
    %s27 = ssub.s32 2, 1
    %28 = vst [vmem:[%s1] sm:%s27] %v25
    %s29 = scalar_lea.vmem [#allocation0], 8
    %v30 = vld [vmem:[%s29] sm:%s24]
    %s32 = ssub.s32 2, 1
    %s33 = scalar_lea.vmem %s1, 1
    %34 = vst [vmem:[%s33] sm:%s32] %v30
    %s35 = scalar_lea.vmem [#allocation0], 16
    %v36 = vld [vmem:[%s35] sm:%s24]
    %s38 = ssub.s32 2, 1
    %s39 = scalar_lea.vmem %s1, 2
    %40 = vst [vmem:[%s39] sm:%s38] %v36
    %s41 = scalar_lea.vmem [#allocation0], 24
    %v42 = vld [vmem:[%s41] sm:%s24]
    %s44 = ssub.s32 2, 1
    %s45 = scalar_lea.vmem %s1, 3
    %46 = vst [vmem:[%s45] sm:%s44] %v42

// kernel: final_patch_expand_x4.1
$region0: #{final_patch_expand_x4.1}
  #allocation0 [shape = 'u32[]', space=smem, size = 0x4, offset = 0x4, fixed_abs, tag = 'smem constant byte address 0x4 - core index']
  #allocation1 [shape = 'u32[72,128]{1,0:T(1,128)}', space=vmem, size = 0x9000, scoped, tag = 'internal scratch']
  %s0 = inlined_call_operand.vmem [shape: f32[2,4,4,32], index: 0, kind: input, shape index: {}]
  %s1 = inlined_call_operand.vmem [shape: f32[32,512], index: 1, kind: input, shape index: {}]
  %s2 = inlined_call_operand.vmem [shape: f32[512,16], index: 2, kind: input, shape index: {}]
  %s3 = inlined_call_operand.vmem [shape: f32[16,512], index: 3, kind: input, shape index: {}]
  %s4 = inlined_call_operand.vmem [shape: f32[1,512], index: 4, kind: input, shape index: {}]
  %s5 = inlined_call_operand.vmem [shape: f32[1,512], index: 5, kind: input, shape index: {}]
  %s6 = inlined_call_operand.vmem [shape: f32[2,4,4,4,128], index: 6, kind: output, shape index: {}]
  %s7 = sld [smem:[#allocation0]]
  $region57: #{final_patch_expand_x4.1} parent=0
    _
  %s9 = ssub.s32 1, %s7
  %s10 = scalar_select 0, %s9, %s7
  loop: start=0, step=1, limit=4
  $region2: #{final_patch_expand_x4.1} parent=0 // loop_pre_header
    _
  $region3: #{final_patch_expand_x4.1} parent=0 // loop_header
    %s12 = sphi 0, %s16
    %p13 = scmp.ge.s32.totalorder %s12, 4
    %s19 = sphi 0, %s31
    %s20 = sphi 0, %s27
    %s21 = sphi 0, %s19
    %s22 = sphi 0, %s20
    %s23 = sphi 0, %s21
    %s24 = sphi 0, %s22
    %s36 = sphi 0, %s38
    %s39 = sphi 0, %s36
    %s40 = sphi 0, %s39
    %s56 = sphi 0, %s40
    %s60 = sphi 0, %s60
    %s62 = sphi 0, %s60
    %s63 = sphi 0, %s62
    %s77 = sphi 0, %s63
    %s81 = sphi 0, %s81
    %s83 = sphi 0, %s81
    %s84 = sphi 0, %s83
    %s98 = sphi 0, %s84
    %s102 = sphi 0, %s102
    %s104 = sphi 0, %s102
    %s105 = sphi 0, %s104
    %s119 = sphi 0, %s105
    %s123 = sphi 0, %s123
    %s125 = sphi 0, %s123
    %s126 = sphi 0, %s125
    %s140 = sphi 0, %s126
    %s144 = sphi 0, %s144
    %s146 = sphi 0, %s144
    %s147 = sphi 0, %s146
    %s161 = sphi 0, %s147
    %s169 = sphi 0, %s171
    %s172 = sphi 0, %s169
    %s173 = sphi 0, %s172
    %s189 = sphi 0, %s173
  $region4: #{final_patch_expand_x4.1} parent=0 // loop_header_branch
    %15 = sbr.rel (%p13) target = $region8
  $region5: #{final_patch_expand_x4.1} parent=0 // loop_body
    %s17 = ssub.s32 %s12, 1
    %s18 = ssub.s32 %s12, 2
    %s25 = sadd.s32 1, %s20
    %p26 = scmp.ge.s32.totalorder %s25, 1
    %s27 = scalar_select %p26, 0, %s25
    %s28 = sadd.s32 1, %s19
    %s29 = scalar_select %p26, %s28, %s19
    %p30 = scmp.ge.s32.totalorder %s29, 2
    %s31 = scalar_select %p30, 0, %s29
    %s32 = ssub.s32 %s19, %s31
    %s33 = ssub.s32 %s20, %s27
    %s34 = sor.u32 %s32, %s33
    %p35 = scmp.eq.s32.totalorder %s34, 0
    %s37 = sadd.s32 %s36, 1
    %s38 = scalar_select %p35, %s36, %s37
    %p41 = pneg %p35
    %p42 = scmp.eq.s32.totalorder %s12, 1
    %p43 = por %p41, %p42
    %p44 = scmp.ne.s32.totalorder %s36, %s39
    %p45 = scmp.eq.s32.totalorder %s12, 0
    %p46 = por %p44, %p45
    %p47 = scmp.ne.s32.totalorder %s36, %s39
    %p48 = scmp.eq.s32.totalorder %s17, 1
    %p49 = por %p47, %p48
    %p50 = scmp.ne.s32.totalorder %s39, %s40
    %p51 = scmp.eq.s32.totalorder %s17, 0
    %p52 = por %p50, %p51
    %p53 = scmp.ne.s32.totalorder %s39, %s40
    %p54 = scmp.eq.s32.totalorder %s18, 1
    %p55 = por %p53, %p54
    %p57 = scmp.ne.s32.totalorder %s40, %s56
    %p58 = scmp.eq.s32.totalorder %s18, 0
    %p59 = por %p57, %p58
    %s61 = sadd.s32 %s60, 1
    %p64 = scmp.eq.s32.totalorder %s12, 1
    %p65 = scmp.ne.s32.totalorder %s60, %s62
    %p66 = scmp.eq.s32.totalorder %s12, 0
    %p67 = por %p65, %p66
    %p68 = scmp.ne.s32.totalorder %s60, %s62
    %p69 = scmp.eq.s32.totalorder %s17, 1
    %p70 = por %p68, %p69
    %p71 = scmp.ne.s32.totalorder %s62, %s63
    %p72 = scmp.eq.s32.totalorder %s17, 0
    %p73 = por %p71, %p72
    %p74 = scmp.ne.s32.totalorder %s62, %s63
    %p75 = scmp.eq.s32.totalorder %s18, 1
    %p76 = por %p74, %p75
    %p78 = scmp.ne.s32.totalorder %s63, %s77
    %p79 = scmp.eq.s32.totalorder %s18, 0
    %p80 = por %p78, %p79
    %s82 = sadd.s32 %s81, 1
    %p85 = scmp.eq.s32.totalorder %s12, 1
    %p86 = scmp.ne.s32.totalorder %s81, %s83
    %p87 = scmp.eq.s32.totalorder %s12, 0
    %p88 = por %p86, %p87
    %p89 = scmp.ne.s32.totalorder %s81, %s83
    %p90 = scmp.eq.s32.totalorder %s17, 1
    %p91 = por %p89, %p90
    %p92 = scmp.ne.s32.totalorder %s83, %s84
    %p93 = scmp.eq.s32.totalorder %s17, 0
    %p94 = por %p92, %p93
    %p95 = scmp.ne.s32.totalorder %s83, %s84
    %p96 = scmp.eq.s32.totalorder %s18, 1
    %p97 = por %p95, %p96
    %p99 = scmp.ne.s32.totalorder %s84, %s98
    %p100 = scmp.eq.s32.totalorder %s18, 0
    %p101 = por %p99, %p100
    %s103 = sadd.s32 %s102, 1
    %p106 = scmp.eq.s32.totalorder %s12, 1
    %p107 = scmp.ne.s32.totalorder %s102, %s104
    %p108 = scmp.eq.s32.totalorder %s12, 0
    %p109 = por %p107, %p108
    %p110 = scmp.ne.s32.totalorder %s102, %s104
    %p111 = scmp.eq.s32.totalorder %s17, 1
    %p112 = por %p110, %p111
    %p113 = scmp.ne.s32.totalorder %s104, %s105
    %p114 = scmp.eq.s32.totalorder %s17, 0
    %p115 = por %p113, %p114
    %p116 = scmp.ne.s32.totalorder %s104, %s105
    %p117 = scmp.eq.s32.totalorder %s18, 1
    %p118 = por %p116, %p117
    %p120 = scmp.ne.s32.totalorder %s105, %s119
    %p121 = scmp.eq.s32.totalorder %s18, 0
    %p122 = por %p120, %p121
    %s124 = sadd.s32 %s123, 1
    %p127 = scmp.eq.s32.totalorder %s12, 1
    %p128 = scmp.ne.s32.totalorder %s123, %s125
    %p129 = scmp.eq.s32.totalorder %s12, 0
    %p130 = por %p128, %p129
    %p131 = scmp.ne.s32.totalorder %s123, %s125
    %p132 = scmp.eq.s32.totalorder %s17, 1
    %p133 = por %p131, %p132
    %p134 = scmp.ne.s32.totalorder %s125, %s126
    %p135 = scmp.eq.s32.totalorder %s17, 0
    %p136 = por %p134, %p135
    %p137 = scmp.ne.s32.totalorder %s125, %s126
    %p138 = scmp.eq.s32.totalorder %s18, 1
    %p139 = por %p137, %p138
    %p141 = scmp.ne.s32.totalorder %s126, %s140
    %p142 = scmp.eq.s32.totalorder %s18, 0
    %p143 = por %p141, %p142
    %s145 = sadd.s32 %s144, 1
    %p148 = scmp.eq.s32.totalorder %s12, 1
    %p149 = scmp.ne.s32.totalorder %s144, %s146
    %p150 = scmp.eq.s32.totalorder %s12, 0
    %p151 = por %p149, %p150
    %p152 = scmp.ne.s32.totalorder %s144, %s146
    %p153 = scmp.eq.s32.totalorder %s17, 1
    %p154 = por %p152, %p153
    %p155 = scmp.ne.s32.totalorder %s146, %s147
    %p156 = scmp.eq.s32.totalorder %s17, 0
    %p157 = por %p155, %p156
    %p158 = scmp.ne.s32.totalorder %s146, %s147
    %p159 = scmp.eq.s32.totalorder %s18, 1
    %p160 = por %p158, %p159
    %p162 = scmp.ne.s32.totalorder %s147, %s161
    %p163 = scmp.eq.s32.totalorder %s18, 0
    %p164 = por %p162, %p163
    %s165 = ssub.s32 %s19, %s31
    %s166 = ssub.s32 %s20, %s27
    %s167 = sor.u32 %s165, %s166
    %p168 = scmp.eq.s32.totalorder %s167, 0
    %s170 = sadd.s32 %s169, 1
    %s171 = scalar_select %p168, %s169, %s170
    %p174 = pneg %p168
    %p175 = scmp.eq.s32.totalorder %s12, 1
    %p176 = por %p174, %p175
    %p177 = scmp.ne.s32.totalorder %s169, %s172
    %p178 = scmp.eq.s32.totalorder %s12, 0
    %p179 = por %p177, %p178
    %p180 = scmp.ne.s32.totalorder %s169, %s172
    %p181 = scmp.eq.s32.totalorder %s17, 1
    %p182 = por %p180, %p181
    %p183 = scmp.ne.s32.totalorder %s172, %s173
    %p184 = scmp.eq.s32.totalorder %s17, 0
    %p185 = por %p183, %p184
    %p186 = scmp.ne.s32.totalorder %s172, %s173
    %p187 = scmp.eq.s32.totalorder %s18, 1
    %p188 = por %p186, %p187
    %p190 = scmp.ne.s32.totalorder %s173, %s189
    %p191 = scmp.eq.s32.totalorder %s18, 0
    %p192 = por %p190, %p191
    %p193 = scmp.le.s32.totalorder 1, %s12
    %p194 = scmp.lt.s32.totalorder %s12, 3
    %p195 = pnand %p193, %p194
    %p196 = pneg %p195
    // Predicated region
    $region9: #{final_patch_expand_x4.1} parent=5 // pred_check
      _
    $region10: #{final_patch_expand_x4.1} parent=5 // pred_check_branch
      %198 = sbr.rel (%p195) target = $region12
    $region11: #{final_patch_expand_x4.1} parent=5 // pred_region
      %s199 = ssub.s32 %s12, 1
      // Predicated region
      $region13: #{final_patch_expand_x4.1} parent=11 // pred_check
        %p200 = pneg %p73
      $region14: #{final_patch_expand_x4.1} parent=11 // pred_check_branch
        %202 = sbr.rel (%p200) target = $region16
      $region15: #{final_patch_expand_x4.1} parent=11 // pred_region
        _
      $region16: #{final_patch_expand_x4.1} parent=11 // pred_fallthru
        _
      // Predicated region
      $region17: #{final_patch_expand_x4.1} parent=11 // pred_check
        %p203 = pneg %p94
      $region18: #{final_patch_expand_x4.1} parent=11 // pred_check_branch
        %205 = sbr.rel (%p203) target = $region20
      $region19: #{final_patch_expand_x4.1} parent=11 // pred_region
        _
      $region20: #{final_patch_expand_x4.1} parent=11 // pred_fallthru
        _
      // Predicated region
      $region21: #{final_patch_expand_x4.1} parent=11 // pred_check
        %p206 = pneg %p115
      $region22: #{final_patch_expand_x4.1} parent=11 // pred_check_branch
        %208 = sbr.rel (%p206) target = $region24
      $region23: #{final_patch_expand_x4.1} parent=11 // pred_region
        _
      $region24: #{final_patch_expand_x4.1} parent=11 // pred_fallthru
        _
      // Predicated region
      $region25: #{final_patch_expand_x4.1} parent=11 // pred_check
        %p209 = pneg %p136
      $region26: #{final_patch_expand_x4.1} parent=11 // pred_check_branch
        %211 = sbr.rel (%p209) target = $region28
      $region27: #{final_patch_expand_x4.1} parent=11 // pred_region
        _
      $region28: #{final_patch_expand_x4.1} parent=11 // pred_fallthru
        _
      // Predicated region
      $region29: #{final_patch_expand_x4.1} parent=11 // pred_check
        %p212 = pneg %p157
      $region30: #{final_patch_expand_x4.1} parent=11 // pred_check_branch
        %214 = sbr.rel (%p212) target = $region32
      $region31: #{final_patch_expand_x4.1} parent=11 // pred_region
        _
      $region32: #{final_patch_expand_x4.1} parent=11 // pred_fallthru
        _
    $region12: #{final_patch_expand_x4.1} parent=5 // pred_fallthru
      _
    %p215 = scmp.lt.s32.totalorder %s12, 2
    // Predicated region
    $region33: #{final_patch_expand_x4.1} parent=5 // pred_check
      %p216 = pneg %p215
    $region34: #{final_patch_expand_x4.1} parent=5 // pred_check_branch
      %218 = sbr.rel (%p216) target = $region36
    $region35: #{final_patch_expand_x4.1} parent=5 // pred_region
      // Predicated region
      $region37: #{final_patch_expand_x4.1} parent=35 // pred_check
        %p219 = pneg %p46
      $region38: #{final_patch_expand_x4.1} parent=35 // pred_check_branch
        %221 = sbr.rel (%p219) target = $region40
      $region39: #{final_patch_expand_x4.1} parent=35 // pred_region
        %s222 = smul.u32 4, %s20
        %p223 = scmp.lt.s32.totalorder %s19, 1
        %s224 = scalar_select %p223, %s19, 1
        %p225 = scmp.lt.s32.totalorder %s222, 3
        %s226 = scalar_select %p225, %s222, 3
        %s227 = smul.addr %s224, 4
        %s228 = sadd.s32 %s226, %s227
        %s229 = smul.addr %s228, 4
        %s230 = scalar_lea.vmem %s0, %s229
        %s231 = smul.u32 4, %s20
      $region40: #{final_patch_expand_x4.1} parent=35 // pred_fallthru
        _
    $region36: #{final_patch_expand_x4.1} parent=5 // pred_fallthru
      _
    %p232 = scmp.le.s32.totalorder 1, %s12
    %p233 = scmp.lt.s32.totalorder %s12, 3
    %p234 = pnand %p232, %p233
    %p235 = pneg %p234
    // Predicated region
    $region41: #{final_patch_expand_x4.1} parent=5 // pred_check
      _
    $region42: #{final_patch_expand_x4.1} parent=5 // pred_check_branch
      %237 = sbr.rel (%p234) target = $region44
    $region43: #{final_patch_expand_x4.1} parent=5 // pred_region
      %s238 = ssub.s32 %s12, 1
      %s239 = smul.u32 4, %s22
      %p240 = scmp.lt.s32.totalorder %s21, 1
      %s241 = scalar_select %p240, %s21, 1
      %p242 = scmp.lt.s32.totalorder %s239, 3
      %s243 = scalar_select %p242, %s239, 3
      %s244 = smul.addr %s241, 4
      %s245 = sadd.s32 %s243, %s244
      %s246 = smul.addr %s245, 4
      %s247 = scalar_lea.vmem %s0, %s246
      %p248 = pneg %p52
      %p249 = pneg %p49
      %p250 = pneg %p73
      %p251 = pneg %p70
      %p252 = pneg %p94
      %p253 = pneg %p91
      %p254 = pneg %p115
      %p255 = pneg %p112
      %p256 = pneg %p136
      %p257 = pneg %p133
      %p258 = pneg %p157
      %p259 = pneg %p154
      %p260 = pneg %p185
      %p261 = pneg %p182
      %s262 = smul.u32 4, %s22
      %p263 = scmp.lt.s32.totalorder %s21, 1
      %s264 = scalar_select %p263, %s21, 1
      %p265 = scmp.lt.s32.totalorder %s262, 3
      %s266 = scalar_select %p265, %s262, 3
      %s267 = smul.addr %s266, 4
      %s268 = smul.addr %s264, 16
      %s269 = sadd.s32 %s267, %s268
      %s270 = smul.addr %s269, 4
      %s271 = scalar_lea.vmem %s6, %s270
      %s272 = smul.u32 4, %s22
      %p273 = scmp.lt.s32.totalorder %s21, 1
      %s274 = scalar_select %p273, %s21, 1
      %p275 = scmp.lt.s32.totalorder %s272, 3
      %s276 = scalar_select %p275, %s272, 3
      %s277 = smul.addr %s274, 4
      %s278 = sadd.s32 %s276, %s277
      %s279 = smul.addr %s278, 4
      %s280 = scalar_lea.vmem %s0, %s279
      %s281 = smul.u32 4, %s22
      %s282 = smul.u32 4, %s22
      %p283 = scmp.lt.s32.totalorder %s21, 1
      %s284 = scalar_select %p283, %s21, 1
      %p285 = scmp.lt.s32.totalorder %s282, 3
      %s286 = scalar_select %p285, %s282, 3
      %s287 = smul.addr %s286, 4
      %s288 = smul.addr %s284, 16
      %s289 = sadd.s32 %s287, %s288
      %s290 = smul.addr %s289, 4
      %s291 = scalar_lea.vmem %s6, %s290
      %s292 = smul.u32 4, %s22
      %v293 = vld [vmem:[%s1] sm:$0xff]
      %v294 = vld [vmem:[%s1 + $0x8] sm:$0xff]
      %v295 = vld [vmem:[%s1 + $0x10] sm:$0xff]
      %v296 = vld [vmem:[%s1 + $0x18] sm:$0xff]
      %v297 = vld [vmem:[%s1 + $0x20] sm:$0xff]
      %v298 = vld [vmem:[%s1 + $0x28] sm:$0xff]
      %v299 = vld [vmem:[%s1 + $0x30] sm:$0xff]
      %v300 = vld [vmem:[%s1 + $0x38] sm:$0xff]
      %v301 = vld [vmem:[%s1 + $0x40] sm:$0xff]
      %v302 = vld [vmem:[%s1 + $0x48] sm:$0xff]
      %v303 = vld [vmem:[%s1 + $0x50] sm:$0xff]
      %v304 = vld [vmem:[%s1 + $0x58] sm:$0xff]
      %v305 = vld [vmem:[%s1 + $0x60] sm:$0xff]
      %v306 = vld [vmem:[%s1 + $0x68] sm:$0xff]
      %v307 = vld [vmem:[%s1 + $0x70] sm:$0xff]
      %v308 = vld [vmem:[%s1 + $0x78] sm:$0xff]
      %v309 = vld [vmem:[%s2] sm:$0xff]
      %v310 = vld [vmem:[%s2 + $0x8] sm:$0xff]
      %v311 = vld [vmem:[%s2 + $0x10] sm:$0xff]
      %v312 = vld [vmem:[%s2 + $0x18] sm:$0xff]
      %v313 = vld [vmem:[%s2 + $0x20] sm:$0xff]
      %v314 = vld [vmem:[%s2 + $0x28] sm:$0xff]
      %v315 = vld [vmem:[%s2 + $0x30] sm:$0xff]
      %v316 = vld [vmem:[%s2 + $0x38] sm:$0xff]
      %v317 = vld [vmem:[%s2 + $0x40] sm:$0xff]
      %v318 = vld [vmem:[%s2 + $0x48] sm:$0xff]
      %v319 = vld [vmem:[%s2 + $0x50] sm:$0xff]
      %v320 = vld [vmem:[%s2 + $0x58] sm:$0xff]
      %v321 = vld [vmem:[%s2 + $0x60] sm:$0xff]
      %v322 = vld [vmem:[%s2 + $0x68] sm:$0xff]
      %v323 = vld [vmem:[%s2 + $0x70] sm:$0xff]
      %v324 = vld [vmem:[%s2 + $0x78] sm:$0xff]
      %v325 = vld [vmem:[%s2 + $0x80] sm:$0xff]
      %v326 = vld [vmem:[%s2 + $0x88] sm:$0xff]
      %v327 = vld [vmem:[%s2 + $0x90] sm:$0xff]
      %v328 = vld [vmem:[%s2 + $0x98] sm:$0xff]
      %v329 = vld [vmem:[%s2 + $0xa0] sm:$0xff]
      %v330 = vld [vmem:[%s2 + $0xa8] sm:$0xff]
      %v331 = vld [vmem:[%s2 + $0xb0] sm:$0xff]
      %v332 = vld [vmem:[%s2 + $0xb8] sm:$0xff]
      %v333 = vld [vmem:[%s2 + $0xc0] sm:$0xff]
      %v334 = vld [vmem:[%s2 + $0xc8] sm:$0xff]
      %v335 = vld [vmem:[%s2 + $0xd0] sm:$0xff]
      %v336 = vld [vmem:[%s2 + $0xd8] sm:$0xff]
      %v337 = vld [vmem:[%s2 + $0xe0] sm:$0xff]
      %v338 = vld [vmem:[%s2 + $0xe8] sm:$0xff]
      %v339 = vld [vmem:[%s2 + $0xf0] sm:$0xff]
      %v340 = vld [vmem:[%s2 + $0xf8] sm:$0xff]
      %v341 = vld [vmem:[%s2 + $0x100] sm:$0xff]
      %v342 = vld [vmem:[%s2 + $0x108] sm:$0xff]
      %v343 = vld [vmem:[%s2 + $0x110] sm:$0xff]
      %v344 = vld [vmem:[%s2 + $0x118] sm:$0xff]
      %v345 = vld [vmem:[%s2 + $0x120] sm:$0xff]
      %v346 = vld [vmem:[%s2 + $0x128] sm:$0xff]
      %v347 = vld [vmem:[%s2 + $0x130] sm:$0xff]
      %v348 = vld [vmem:[%s2 + $0x138] sm:$0xff]
      %v349 = vld [vmem:[%s2 + $0x140] sm:$0xff]
      %v350 = vld [vmem:[%s2 + $0x148] sm:$0xff]
      %v351 = vld [vmem:[%s2 + $0x150] sm:$0xff]
      %v352 = vld [vmem:[%s2 + $0x158] sm:$0xff]
      %v353 = vld [vmem:[%s2 + $0x160] sm:$0xff]
      %v354 = vld [vmem:[%s2 + $0x168] sm:$0xff]
      %v355 = vld [vmem:[%s2 + $0x170] sm:$0xff]
      %v356 = vld [vmem:[%s2 + $0x178] sm:$0xff]
      %v357 = vld [vmem:[%s2 + $0x180] sm:$0xff]
      %v358 = vld [vmem:[%s2 + $0x188] sm:$0xff]
      %v359 = vld [vmem:[%s2 + $0x190] sm:$0xff]
      %v360 = vld [vmem:[%s2 + $0x198] sm:$0xff]
      %v361 = vld [vmem:[%s2 + $0x1a0] sm:$0xff]
      %v362 = vld [vmem:[%s2 + $0x1a8] sm:$0xff]
      %v363 = vld [vmem:[%s2 + $0x1b0] sm:$0xff]
      %v364 = vld [vmem:[%s2 + $0x1b8] sm:$0xff]
      %v365 = vld [vmem:[%s2 + $0x1c0] sm:$0xff]
      %v366 = vld [vmem:[%s2 + $0x1c8] sm:$0xff]
      %v367 = vld [vmem:[%s2 + $0x1d0] sm:$0xff]
      %v368 = vld [vmem:[%s2 + $0x1d8] sm:$0xff]
      %v369 = vld [vmem:[%s2 + $0x1e0] sm:$0xff]
      %v370 = vld [vmem:[%s2 + $0x1e8] sm:$0xff]
      %v371 = vld [vmem:[%s2 + $0x1f0] sm:$0xff]
      %v372 = vld [vmem:[%s2 + $0x1f8] sm:$0xff]
      %v373 = vld [vmem:[%s3] sm:$0xff]
      %v374 = vld [vmem:[%s3 + $0x8] sm:$0xff]
      %v375 = vld [vmem:[%s3 + $0x10] sm:$0xff]
      %v376 = vld [vmem:[%s3 + $0x18] sm:$0xff]
      %v377 = vld [vmem:[%s3 + $0x20] sm:$0xff]
      %v378 = vld [vmem:[%s3 + $0x28] sm:$0xff]
      %v379 = vld [vmem:[%s3 + $0x30] sm:$0xff]
      %v380 = vld [vmem:[%s3 + $0x38] sm:$0xff]
      %v381 = vld [vmem:[%s4] sm:$0xf]
      %v382 = vld [vmem:[%s5] sm:$0xf]
      %v383 = vld [vmem:[%s280] sm:$0xf]
      %vm384 = vcmask 261120
      %v386 = vsel %vm384, %v383, 0
      %388 = vmatpush.msra.mxu0 0.0
      %389 = vmatpush.msra.mxu0 0.0
      %390 = vmatpush.msra.mxu0 0.0
      %391 = vmatpush.msra.mxu0 0.0
      %392 = vmatpush.msra.mxu0 0.0
      %393 = vmatpush.msra.mxu0 0.0
      %394 = vmatpush.msra.mxu0 0.0
      %395 = vmatpush.msra.mxu0 0.0
      %396 = vmatpush.msra.mxu0 0.0
      %397 = vmatpush.msra.mxu0 0.0
      %398 = vmatpush.msra.mxu0 0.0
      %399 = vmatpush.msra.mxu0 0.0
      %400 = vmatpush.msra.mxu0 %v305
      %401 = vmatpush.msra.mxu0 %v301
      %402 = vmatpush.msra.mxu0 %v297
      %403 = vmatpush.msra.mxu0 %v293
      %404 = vmatmul.f32.gmra.mxu0 %v386
      %v405 = vpop.f32.mrf.mxu0
      %v406 = vadd.f32 0.0, %v405
      %407 = vdwg.mxu0
      %408 = vmatpush.msra.mxu0 0.0
      %409 = vmatpush.msra.mxu0 0.0
      %410 = vmatpush.msra.mxu0 0.0
      %411 = vmatpush.msra.mxu0 0.0
      %412 = vmatpush.msra.mxu0 0.0
      %413 = vmatpush.msra.mxu0 0.0
      %414 = vmatpush.msra.mxu0 0.0
      %415 = vmatpush.msra.mxu0 0.0
      %416 = vmatpush.msra.mxu0 0.0
      %417 = vmatpush.msra.mxu0 0.0
      %418 = vmatpush.msra.mxu0 0.0
      %419 = vmatpush.msra.mxu0 0.0
      %420 = vmatpush.msra.mxu0 %v306
      %421 = vmatpush.msra.mxu0 %v302
      %422 = vmatpush.msra.mxu0 %v298
      %423 = vmatpush.msra.mxu0 %v294
      %424 = vmatmul.f32.gmra.mxu0 %v386
      %v425 = vpop.f32.mrf.mxu0
      %v426 = vadd.f32 0.0, %v425
      %427 = vdwg.mxu0
      %428 = vmatpush.msra.mxu0 0.0
      %429 = vmatpush.msra.mxu0 0.0
      %430 = vmatpush.msra.mxu0 0.0
      %431 = vmatpush.msra.mxu0 0.0
      %432 = vmatpush.msra.mxu0 0.0
      %433 = vmatpush.msra.mxu0 0.0
      %434 = vmatpush.msra.mxu0 0.0
      %435 = vmatpush.msra.mxu0 0.0
      %436 = vmatpush.msra.mxu0 0.0
      %437 = vmatpush.msra.mxu0 0.0
      %438 = vmatpush.msra.mxu0 0.0
      %439 = vmatpush.msra.mxu0 0.0
      %440 = vmatpush.msra.mxu0 %v307
      %441 = vmatpush.msra.mxu0 %v303
      %442 = vmatpush.msra.mxu0 %v299
      %443 = vmatpush.msra.mxu0 %v295
      %444 = vmatmul.f32.gmra.mxu0 %v386
      %v445 = vpop.f32.mrf.mxu0
      %v446 = vadd.f32 0.0, %v445
      %447 = vdwg.mxu0
      %448 = vmatpush.msra.mxu0 0.0
      %449 = vmatpush.msra.mxu0 0.0
      %450 = vmatpush.msra.mxu0 0.0
      %451 = vmatpush.msra.mxu0 0.0
      %452 = vmatpush.msra.mxu0 0.0
      %453 = vmatpush.msra.mxu0 0.0
      %454 = vmatpush.msra.mxu0 0.0
      %455 = vmatpush.msra.mxu0 0.0
      %456 = vmatpush.msra.mxu0 0.0
      %457 = vmatpush.msra.mxu0 0.0
      %458 = vmatpush.msra.mxu0 0.0
      %459 = vmatpush.msra.mxu0 0.0
      %460 = vmatpush.msra.mxu0 %v308
      %461 = vmatpush.msra.mxu0 %v304
      %462 = vmatpush.msra.mxu0 %v300
      %463 = vmatpush.msra.mxu0 %v296
      %464 = vmatmul.f32.gmra.mxu0 %v386
      %v465 = vpop.f32.mrf.mxu0
      %v466 = vadd.f32 0.0, %v465
      %467 = vdwg.mxu0
      %468 = vmatpush.msra.mxu0 %v324
      %469 = vmatpush.msra.mxu0 %v323
      %470 = vmatpush.msra.mxu0 %v322
      %471 = vmatpush.msra.mxu0 %v321
      %472 = vmatpush.msra.mxu0 %v320
      %473 = vmatpush.msra.mxu0 %v319
      %474 = vmatpush.msra.mxu0 %v318
      %475 = vmatpush.msra.mxu0 %v317
      %476 = vmatpush.msra.mxu0 %v316
      %477 = vmatpush.msra.mxu0 %v315
      %478 = vmatpush.msra.mxu0 %v314
      %479 = vmatpush.msra.mxu0 %v313
      %480 = vmatpush.msra.mxu0 %v312
      %481 = vmatpush.msra.mxu0 %v311
      %482 = vmatpush.msra.mxu0 %v310
      %483 = vmatpush.msra.mxu0 %v309
      %484 = vmatmul.f32.gmra.mxu0 %v406
      %v485 = vpop.f32.mrf.mxu0
      %v486 = vadd.f32 0.0, %v485
      %487 = vdwg.mxu0
      %488 = vmatpush.msra.mxu0 %v340
      %489 = vmatpush.msra.mxu0 %v339
      %490 = vmatpush.msra.mxu0 %v338
      %491 = vmatpush.msra.mxu0 %v337
      %492 = vmatpush.msra.mxu0 %v336
      %493 = vmatpush.msra.mxu0 %v335
      %494 = vmatpush.msra.mxu0 %v334
      %495 = vmatpush.msra.mxu0 %v333
      %496 = vmatpush.msra.mxu0 %v332
      %497 = vmatpush.msra.mxu0 %v331
      %498 = vmatpush.msra.mxu0 %v330
      %499 = vmatpush.msra.mxu0 %v329
      %500 = vmatpush.msra.mxu0 %v328
      %501 = vmatpush.msra.mxu0 %v327
      %502 = vmatpush.msra.mxu0 %v326
      %503 = vmatpush.msra.mxu0 %v325
      %504 = vmatmul.f32.gmra.mxu0 %v426
      %v505 = vpop.f32.mrf.mxu0
      %v506 = vadd.f32 %v486, %v505
      %507 = vdwg.mxu0
      %508 = vmatpush.msra.mxu0 %v356
      %509 = vmatpush.msra.mxu0 %v355
      %510 = vmatpush.msra.mxu0 %v354
      %511 = vmatpush.msra.mxu0 %v353
      %512 = vmatpush.msra.mxu0 %v352
      %513 = vmatpush.msra.mxu0 %v351
      %514 = vmatpush.msra.mxu0 %v350
      %515 = vmatpush.msra.mxu0 %v349
      %516 = vmatpush.msra.mxu0 %v348
      %517 = vmatpush.msra.mxu0 %v347
      %518 = vmatpush.msra.mxu0 %v346
      %519 = vmatpush.msra.mxu0 %v345
      %520 = vmatpush.msra.mxu0 %v344
      %521 = vmatpush.msra.mxu0 %v343
      %522 = vmatpush.msra.mxu0 %v342
      %523 = vmatpush.msra.mxu0 %v341
      %524 = vmatmul.f32.gmra.mxu0 %v446
      %v525 = vpop.f32.mrf.mxu0
      %v526 = vadd.f32 %v506, %v525
      %527 = vdwg.mxu0
      %528 = vmatpush.msra.mxu0 %v372
      %529 = vmatpush.msra.mxu0 %v371
      %530 = vmatpush.msra.mxu0 %v370
      %531 = vmatpush.msra.mxu0 %v369
      %532 = vmatpush.msra.mxu0 %v368
      %533 = vmatpush.msra.mxu0 %v367
      %534 = vmatpush.msra.mxu0 %v366
      %535 = vmatpush.msra.mxu0 %v365
      %536 = vmatpush.msra.mxu0 %v364
      %537 = vmatpush.msra.mxu0 %v363
      %538 = vmatpush.msra.mxu0 %v362
      %539 = vmatpush.msra.mxu0 %v361
      %540 = vmatpush.msra.mxu0 %v360
      %541 = vmatpush.msra.mxu0 %v359
      %542 = vmatpush.msra.mxu0 %v358
      %543 = vmatpush.msra.mxu0 %v357
      %544 = vmatmul.f32.gmra.mxu0 %v466
      %v545 = vpop.f32.mrf.mxu0
      %v546 = vadd.f32 %v526, %v545
      %547 = vdwg.mxu0
      %vm548 = vcmask 130048
      %v550 = vsel %vm548, %v546, 0
      %552 = vmatpush.msra.mxu0 0.0
      %553 = vmatpush.msra.mxu0 0.0
      %554 = vmatpush.msra.mxu0 0.0
      %555 = vmatpush.msra.mxu0 0.0
      %556 = vmatpush.msra.mxu0 0.0
      %557 = vmatpush.msra.mxu0 0.0
      %558 = vmatpush.msra.mxu0 0.0
      %559 = vmatpush.msra.mxu0 0.0
      %560 = vmatpush.msra.mxu0 0.0
      %561 = vmatpush.msra.mxu0 0.0
      %562 = vmatpush.msra.mxu0 0.0
      %563 = vmatpush.msra.mxu0 0.0
      %564 = vmatpush.msra.mxu0 0.0
      %565 = vmatpush.msra.mxu0 0.0
      %566 = vmatpush.msra.mxu0 %v377
      %567 = vmatpush.msra.mxu0 %v373
      %568 = vmatmul.f32.gmra.mxu0 %v550
      %v569 = vpop.f32.mrf.mxu0
      %v570 = vadd.f32 0.0, %v569
      %571 = vdwg.mxu0
      %572 = vmatpush.msra.mxu0 0.0
      %573 = vmatpush.msra.mxu0 0.0
      %574 = vmatpush.msra.mxu0 0.0
      %575 = vmatpush.msra.mxu0 0.0
      %576 = vmatpush.msra.mxu0 0.0
      %577 = vmatpush.msra.mxu0 0.0
      %578 = vmatpush.msra.mxu0 0.0
      %579 = vmatpush.msra.mxu0 0.0
      %580 = vmatpush.msra.mxu0 0.0
      %581 = vmatpush.msra.mxu0 0.0
      %582 = vmatpush.msra.mxu0 0.0
      %583 = vmatpush.msra.mxu0 0.0
      %584 = vmatpush.msra.mxu0 0.0
      %585 = vmatpush.msra.mxu0 0.0
      %586 = vmatpush.msra.mxu0 %v378
      %587 = vmatpush.msra.mxu0 %v374
      %588 = vmatmul.f32.gmra.mxu0 %v550
      %v589 = vpop.f32.mrf.mxu0
      %v590 = vadd.f32 0.0, %v589
      %591 = vdwg.mxu0
      %592 = vmatpush.msra.mxu0 0.0
      %593 = vmatpush.msra.mxu0 0.0
      %594 = vmatpush.msra.mxu0 0.0
      %595 = vmatpush.msra.mxu0 0.0
      %596 = vmatpush.msra.mxu0 0.0
      %597 = vmatpush.msra.mxu0 0.0
      %598 = vmatpush.msra.mxu0 0.0
      %599 = vmatpush.msra.mxu0 0.0
      %600 = vmatpush.msra.mxu0 0.0
      %601 = vmatpush.msra.mxu0 0.0
      %602 = vmatpush.msra.mxu0 0.0
      %603 = vmatpush.msra.mxu0 0.0
      %604 = vmatpush.msra.mxu0 0.0
      %605 = vmatpush.msra.mxu0 0.0
      %606 = vmatpush.msra.mxu0 %v379
      %607 = vmatpush.msra.mxu0 %v375
      %608 = vmatmul.f32.gmra.mxu0 %v550
      %v609 = vpop.f32.mrf.mxu0
      %v610 = vadd.f32 0.0, %v609
      %611 = vdwg.mxu0
      %612 = vmatpush.msra.mxu0 0.0
      %613 = vmatpush.msra.mxu0 0.0
      %614 = vmatpush.msra.mxu0 0.0
      %615 = vmatpush.msra.mxu0 0.0
      %616 = vmatpush.msra.mxu0 0.0
      %617 = vmatpush.msra.mxu0 0.0
      %618 = vmatpush.msra.mxu0 0.0
      %619 = vmatpush.msra.mxu0 0.0
      %620 = vmatpush.msra.mxu0 0.0
      %621 = vmatpush.msra.mxu0 0.0
      %622 = vmatpush.msra.mxu0 0.0
      %623 = vmatpush.msra.mxu0 0.0
      %624 = vmatpush.msra.mxu0 0.0
      %625 = vmatpush.msra.mxu0 0.0
      %626 = vmatpush.msra.mxu0 %v380
      %627 = vmatpush.msra.mxu0 %v376
      %628 = vmatmul.f32.gmra.mxu0 %v550
      %v629 = vpop.f32.mrf.mxu0
      %v630 = vadd.f32 0.0, %v629
      %631 = vdwg.mxu0
      %v632 = vsub.f32 %v406, %v570
      %v633 = vsub.f32 %v426, %v590
      %v634 = vsub.f32 %v446, %v610
      %v635 = vsub.f32 %v466, %v630
      %v636 = vmul.f32 %v632, %v632
      %v637 = vmul.f32 %v633, %v633
      %v638 = vmul.f32 %v634, %v634
      %v639 = vmul.f32 %v635, %v635
      %640 = vmatpush.msra.mxu0 %v324
      %641 = vmatpush.msra.mxu0 %v323
      %642 = vmatpush.msra.mxu0 %v322
      %643 = vmatpush.msra.mxu0 %v321
      %644 = vmatpush.msra.mxu0 %v320
      %645 = vmatpush.msra.mxu0 %v319
      %646 = vmatpush.msra.mxu0 %v318
      %647 = vmatpush.msra.mxu0 %v317
      %648 = vmatpush.msra.mxu0 %v316
      %649 = vmatpush.msra.mxu0 %v315
      %650 = vmatpush.msra.mxu0 %v314
      %651 = vmatpush.msra.mxu0 %v313
      %652 = vmatpush.msra.mxu0 %v312
      %653 = vmatpush.msra.mxu0 %v311
      %654 = vmatpush.msra.mxu0 %v310
      %655 = vmatpush.msra.mxu0 %v309
      %656 = vmatmul.f32.gmra.mxu0 %v636
      %v657 = vpop.f32.mrf.mxu0
      %v658 = vadd.f32 1e-05, %v657
      %659 = vdwg.mxu0
      %660 = vmatpush.msra.mxu0 %v340
      %661 = vmatpush.msra.mxu0 %v339
      %662 = vmatpush.msra.mxu0 %v338
      %663 = vmatpush.msra.mxu0 %v337
      %664 = vmatpush.msra.mxu0 %v336
      %665 = vmatpush.msra.mxu0 %v335
      %666 = vmatpush.msra.mxu0 %v334
      %667 = vmatpush.msra.mxu0 %v333
      %668 = vmatpush.msra.mxu0 %v332
      %669 = vmatpush.msra.mxu0 %v331
      %670 = vmatpush.msra.mxu0 %v330
      %671 = vmatpush.msra.mxu0 %v329
      %672 = vmatpush.msra.mxu0 %v328
      %673 = vmatpush.msra.mxu0 %v327
      %674 = vmatpush.msra.mxu0 %v326
      %675 = vmatpush.msra.mxu0 %v325
      %676 = vmatmul.f32.gmra.mxu0 %v637
      %v677 = vpop.f32.mrf.mxu0
      %v678 = vadd.f32 %v658, %v677
      %679 = vdwg.mxu0
      %680 = vmatpush.msra.mxu0 %v356
      %681 = vmatpush.msra.mxu0 %v355
      %682 = vmatpush.msra.mxu0 %v354
      %683 = vmatpush.msra.mxu0 %v353
      %684 = vmatpush.msra.mxu0 %v352
      %685 = vmatpush.msra.mxu0 %v351
      %686 = vmatpush.msra.mxu0 %v350
      %687 = vmatpush.msra.mxu0 %v349
      %688 = vmatpush.msra.mxu0 %v348
      %689 = vmatpush.msra.mxu0 %v347
      %690 = vmatpush.msra.mxu0 %v346
      %691 = vmatpush.msra.mxu0 %v345
      %692 = vmatpush.msra.mxu0 %v344
      %693 = vmatpush.msra.mxu0 %v343
      %694 = vmatpush.msra.mxu0 %v342
      %695 = vmatpush.msra.mxu0 %v341
      %696 = vmatmul.f32.gmra.mxu0 %v638
      %v697 = vpop.f32.mrf.mxu0
      %v698 = vadd.f32 %v678, %v697
      %699 = vdwg.mxu0
      %700 = vmatpush.msra.mxu0 %v372
      %701 = vmatpush.msra.mxu0 %v371
      %702 = vmatpush.msra.mxu0 %v370
      %703 = vmatpush.msra.mxu0 %v369
      %704 = vmatpush.msra.mxu0 %v368
      %705 = vmatpush.msra.mxu0 %v367
      %706 = vmatpush.msra.mxu0 %v366
      %707 = vmatpush.msra.mxu0 %v365
      %708 = vmatpush.msra.mxu0 %v364
      %709 = vmatpush.msra.mxu0 %v363
      %710 = vmatpush.msra.mxu0 %v362
      %711 = vmatpush.msra.mxu0 %v361
      %712 = vmatpush.msra.mxu0 %v360
      %713 = vmatpush.msra.mxu0 %v359
      %714 = vmatpush.msra.mxu0 %v358
      %715 = vmatpush.msra.mxu0 %v357
      %716 = vmatmul.f32.gmra.mxu0 %v639
      %v717 = vpop.f32.mrf.mxu0
      %v718 = vadd.f32 %v698, %v717
      %719 = vdwg.mxu0
      %v720 = vrsqrt.pop %v718
      %v721 = vmul.f32 %v720, %v718
      %v722 = vmul.f32 %v721, %v720
      %v723 = vmul.f32 0.5, %v722
      %v724 = vsub.f32 1.5, %v723
      %v725 = vmul.f32 %v720, %v724
      %vm726 = vweird.f32 %v718
      %vm727 = vweird.f32 %v720
      %vm728 = vmor %vm726, %vm727
      %v729 = vsel %vm728, %v720, %v725
      %v731 = vsel %vm548, %v729, 0
      %733 = vmatpush.msra.mxu0 0.0
      %734 = vmatpush.msra.mxu0 0.0
      %735 = vmatpush.msra.mxu0 0.0
      %736 = vmatpush.msra.mxu0 0.0
      %737 = vmatpush.msra.mxu0 0.0
      %738 = vmatpush.msra.mxu0 0.0
      %739 = vmatpush.msra.mxu0 0.0
      %740 = vmatpush.msra.mxu0 0.0
      %741 = vmatpush.msra.mxu0 0.0
      %742 = vmatpush.msra.mxu0 0.0
      %743 = vmatpush.msra.mxu0 0.0
      %744 = vmatpush.msra.mxu0 0.0
      %745 = vmatpush.msra.mxu0 0.0
      %746 = vmatpush.msra.mxu0 0.0
      %747 = vmatpush.msra.mxu0 %v377
      %748 = vmatpush.msra.mxu0 %v373
      %749 = vmatmul.f32.gmra.mxu0 %v731
      %v750 = vpop.f32.mrf.mxu0
      %v751 = vadd.f32 0.0, %v750
      %752 = vdwg.mxu0
      %753 = vmatpush.msra.mxu0 0.0
      %754 = vmatpush.msra.mxu0 0.0
      %755 = vmatpush.msra.mxu0 0.0
      %756 = vmatpush.msra.mxu0 0.0
      %757 = vmatpush.msra.mxu0 0.0
      %758 = vmatpush.msra.mxu0 0.0
      %759 = vmatpush.msra.mxu0 0.0
      %760 = vmatpush.msra.mxu0 0.0
      %761 = vmatpush.msra.mxu0 0.0
      %762 = vmatpush.msra.mxu0 0.0
      %763 = vmatpush.msra.mxu0 0.0
      %764 = vmatpush.msra.mxu0 0.0
      %765 = vmatpush.msra.mxu0 0.0
      %766 = vmatpush.msra.mxu0 0.0
      %767 = vmatpush.msra.mxu0 %v378
      %768 = vmatpush.msra.mxu0 %v374
      %769 = vmatmul.f32.gmra.mxu0 %v731
      %v770 = vpop.f32.mrf.mxu0
      %v771 = vadd.f32 0.0, %v770
      %772 = vdwg.mxu0
      %773 = vmatpush.msra.mxu0 0.0
      %774 = vmatpush.msra.mxu0 0.0
      %775 = vmatpush.msra.mxu0 0.0
      %776 = vmatpush.msra.mxu0 0.0
      %777 = vmatpush.msra.mxu0 0.0
      %778 = vmatpush.msra.mxu0 0.0
      %779 = vmatpush.msra.mxu0 0.0
      %780 = vmatpush.msra.mxu0 0.0
      %781 = vmatpush.msra.mxu0 0.0
      %782 = vmatpush.msra.mxu0 0.0
      %783 = vmatpush.msra.mxu0 0.0
      %784 = vmatpush.msra.mxu0 0.0
      %785 = vmatpush.msra.mxu0 0.0
      %786 = vmatpush.msra.mxu0 0.0
      %787 = vmatpush.msra.mxu0 %v379
      %788 = vmatpush.msra.mxu0 %v375
      %789 = vmatmul.f32.gmra.mxu0 %v731
      %v790 = vpop.f32.mrf.mxu0
      %v791 = vadd.f32 0.0, %v790
      %792 = vdwg.mxu0
      %793 = vmatpush.msra.mxu0 0.0
      %794 = vmatpush.msra.mxu0 0.0
      %795 = vmatpush.msra.mxu0 0.0
      %796 = vmatpush.msra.mxu0 0.0
      %797 = vmatpush.msra.mxu0 0.0
      %798 = vmatpush.msra.mxu0 0.0
      %799 = vmatpush.msra.mxu0 0.0
      %800 = vmatpush.msra.mxu0 0.0
      %801 = vmatpush.msra.mxu0 0.0
      %802 = vmatpush.msra.mxu0 0.0
      %803 = vmatpush.msra.mxu0 0.0
      %804 = vmatpush.msra.mxu0 0.0
      %805 = vmatpush.msra.mxu0 0.0
      %806 = vmatpush.msra.mxu0 0.0
      %807 = vmatpush.msra.mxu0 %v380
      %808 = vmatpush.msra.mxu0 %v376
      %809 = vmatmul.f32.gmra.mxu0 %v731
      %v810 = vpop.f32.mrf.mxu0
      %v811 = vadd.f32 0.0, %v810
      %812 = vdwg.mxu0
      %v813 = vmul.f32 %v632, %v751
      %v814 = vmul.f32 %v633, %v771
      %v815 = vmul.f32 %v634, %v791
      %v816 = vmul.f32 %v635, %v811
      %v818 = vperm.slane %v381, 0
      %v819 = vperm.slane %v381, 1
      %v820 = vperm.slane %v381, 2
      %v821 = vperm.slane %v381, 3
      %v826 = vmul.f32 %v813, %v818
      %v827 = vmul.f32 %v814, %v819
      %v828 = vmul.f32 %v815, %v820
      %v829 = vmul.f32 %v816, %v821
      %v831 = vperm.slane %v382, 0
      %v832 = vperm.slane %v382, 1
      %v833 = vperm.slane %v382, 2
      %v834 = vperm.slane %v382, 3
      %v839 = vadd.f32 %v826, %v831
      %v840 = vadd.f32 %v827, %v832
      %v841 = vadd.f32 %v828, %v833
      %v842 = vadd.f32 %v829, %v834
      %843 = vst [vmem:[%s291] sm:$0xf] %v839
      %s844 = scalar_lea.vmem %s291, 4
      %845 = vst [vmem:[%s844] sm:$0xf] %v840
      %s846 = scalar_lea.vmem %s291, 8
      %847 = vst [vmem:[%s846] sm:$0xf] %v841
      %s848 = scalar_lea.vmem %s291, 12
      %849 = vst [vmem:[%s848] sm:$0xf] %v842
      %s850 = scalar_lea.vmem %s280, 4
      %v851 = vld [vmem:[%s850] sm:$0xf]
      %v853 = vsel %vm384, %v851, 0
      %855 = vmatpush.msra.mxu0 0.0
      %856 = vmatpush.msra.mxu0 0.0
      %857 = vmatpush.msra.mxu0 0.0
      %858 = vmatpush.msra.mxu0 0.0
      %859 = vmatpush.msra.mxu0 0.0
      %860 = vmatpush.msra.mxu0 0.0
      %861 = vmatpush.msra.mxu0 0.0
      %862 = vmatpush.msra.mxu0 0.0
      %863 = vmatpush.msra.mxu0 0.0
      %864 = vmatpush.msra.mxu0 0.0
      %865 = vmatpush.msra.mxu0 0.0
      %866 = vmatpush.msra.mxu0 0.0
      %867 = vmatpush.msra.mxu0 %v305
      %868 = vmatpush.msra.mxu0 %v301
      %869 = vmatpush.msra.mxu0 %v297
      %870 = vmatpush.msra.mxu0 %v293
      %871 = vmatmul.f32.gmra.mxu0 %v853
      %v872 = vpop.f32.mrf.mxu0
      %v873 = vadd.f32 0.0, %v872
      %874 = vdwg.mxu0
      %875 = vmatpush.msra.mxu0 0.0
      %876 = vmatpush.msra.mxu0 0.0
      %877 = vmatpush.msra.mxu0 0.0
      %878 = vmatpush.msra.mxu0 0.0
      %879 = vmatpush.msra.mxu0 0.0
      %880 = vmatpush.msra.mxu0 0.0
      %881 = vmatpush.msra.mxu0 0.0
      %882 = vmatpush.msra.mxu0 0.0
      %883 = vmatpush.msra.mxu0 0.0
      %884 = vmatpush.msra.mxu0 0.0
      %885 = vmatpush.msra.mxu0 0.0
      %886 = vmatpush.msra.mxu0 0.0
      %887 = vmatpush.msra.mxu0 %v306
      %888 = vmatpush.msra.mxu0 %v302
      %889 = vmatpush.msra.mxu0 %v298
      %890 = vmatpush.msra.mxu0 %v294
      %891 = vmatmul.f32.gmra.mxu0 %v853
      %v892 = vpop.f32.mrf.mxu0
      %v893 = vadd.f32 0.0, %v892
      %894 = vdwg.mxu0
      %895 = vmatpush.msra.mxu0 0.0
      %896 = vmatpush.msra.mxu0 0.0
      %897 = vmatpush.msra.mxu0 0.0
      %898 = vmatpush.msra.mxu0 0.0
      %899 = vmatpush.msra.mxu0 0.0
      %900 = vmatpush.msra.mxu0 0.0
      %901 = vmatpush.msra.mxu0 0.0
      %902 = vmatpush.msra.mxu0 0.0
      %903 = vmatpush.msra.mxu0 0.0
      %904 = vmatpush.msra.mxu0 0.0
      %905 = vmatpush.msra.mxu0 0.0
      %906 = vmatpush.msra.mxu0 0.0
      %907 = vmatpush.msra.mxu0 %v307
      %908 = vmatpush.msra.mxu0 %v303
      %909 = vmatpush.msra.mxu0 %v299
      %910 = vmatpush.msra.mxu0 %v295
      %911 = vmatmul.f32.gmra.mxu0 %v853
      %v912 = vpop.f32.mrf.mxu0
      %v913 = vadd.f32 0.0, %v912
      %914 = vdwg.mxu0
      %915 = vmatpush.msra.mxu0 0.0
      %916 = vmatpush.msra.mxu0 0.0
      %917 = vmatpush.msra.mxu0 0.0
      %918 = vmatpush.msra.mxu0 0.0
      %919 = vmatpush.msra.mxu0 0.0
      %920 = vmatpush.msra.mxu0 0.0
      %921 = vmatpush.msra.mxu0 0.0
      %922 = vmatpush.msra.mxu0 0.0
      %923 = vmatpush.msra.mxu0 0.0
      %924 = vmatpush.msra.mxu0 0.0
      %925 = vmatpush.msra.mxu0 0.0
      %926 = vmatpush.msra.mxu0 0.0
      %927 = vmatpush.msra.mxu0 %v308
      %928 = vmatpush.msra.mxu0 %v304
      %929 = vmatpush.msra.mxu0 %v300
      %930 = vmatpush.msra.mxu0 %v296
      %931 = vmatmul.f32.gmra.mxu0 %v853
      %v932 = vpop.f32.mrf.mxu0
      %v933 = vadd.f32 0.0, %v932
      %934 = vdwg.mxu0
      %935 = vmatpush.msra.mxu0 %v324
      %936 = vmatpush.msra.mxu0 %v323
      %937 = vmatpush.msra.mxu0 %v322
      %938 = vmatpush.msra.mxu0 %v321
      %939 = vmatpush.msra.mxu0 %v320
      %940 = vmatpush.msra.mxu0 %v319
      %941 = vmatpush.msra.mxu0 %v318
      %942 = vmatpush.msra.mxu0 %v317
      %943 = vmatpush.msra.mxu0 %v316
      %944 = vmatpush.msra.mxu0 %v315
      %945 = vmatpush.msra.mxu0 %v314
      %946 = vmatpush.msra.mxu0 %v313
      %947 = vmatpush.msra.mxu0 %v312
      %948 = vmatpush.msra.mxu0 %v311
      %949 = vmatpush.msra.mxu0 %v310
      %950 = vmatpush.msra.mxu0 %v309
      %951 = vmatmul.f32.gmra.mxu0 %v873
      %v952 = vpop.f32.mrf.mxu0
      %v953 = vadd.f32 0.0, %v952
      %954 = vdwg.mxu0
      %955 = vmatpush.msra.mxu0 %v340
      %956 = vmatpush.msra.mxu0 %v339
      %957 = vmatpush.msra.mxu0 %v338
      %958 = vmatpush.msra.mxu0 %v337
      %959 = vmatpush.msra.mxu0 %v336
      %960 = vmatpush.msra.mxu0 %v335
      %961 = vmatpush.msra.mxu0 %v334
      %962 = vmatpush.msra.mxu0 %v333
      %963 = vmatpush.msra.mxu0 %v332
      %964 = vmatpush.msra.mxu0 %v331
      %965 = vmatpush.msra.mxu0 %v330
      %966 = vmatpush.msra.mxu0 %v329
      %967 = vmatpush.msra.mxu0 %v328
      %968 = vmatpush.msra.mxu0 %v327
      %969 = vmatpush.msra.mxu0 %v326
      %970 = vmatpush.msra.mxu0 %v325
      %971 = vmatmul.f32.gmra.mxu0 %v893
      %v972 = vpop.f32.mrf.mxu0
      %v973 = vadd.f32 %v953, %v972
      %974 = vdwg.mxu0
      %975 = vmatpush.msra.mxu0 %v356
      %976 = vmatpush.msra.mxu0 %v355
      %977 = vmatpush.msra.mxu0 %v354
      %978 = vmatpush.msra.mxu0 %v353
      %979 = vmatpush.msra.mxu0 %v352
      %980 = vmatpush.msra.mxu0 %v351
      %981 = vmatpush.msra.mxu0 %v350
      %982 = vmatpush.msra.mxu0 %v349
      %983 = vmatpush.msra.mxu0 %v348
      %984 = vmatpush.msra.mxu0 %v347
      %985 = vmatpush.msra.mxu0 %v346
      %986 = vmatpush.msra.mxu0 %v345
      %987 = vmatpush.msra.mxu0 %v344
      %988 = vmatpush.msra.mxu0 %v343
      %989 = vmatpush.msra.mxu0 %v342
      %990 = vmatpush.msra.mxu0 %v341
      %991 = vmatmul.f32.gmra.mxu0 %v913
      %v992 = vpop.f32.mrf.mxu0
      %v993 = vadd.f32 %v973, %v992
      %994 = vdwg.mxu0
      %995 = vmatpush.msra.mxu0 %v372
      %996 = vmatpush.msra.mxu0 %v371
      %997 = vmatpush.msra.mxu0 %v370
      %998 = vmatpush.msra.mxu0 %v369
      %999 = vmatpush.msra.mxu0 %v368
      %1000 = vmatpush.msra.mxu0 %v367
      %1001 = vmatpush.msra.mxu0 %v366
      %1002 = vmatpush.msra.mxu0 %v365
      %1003 = vmatpush.msra.mxu0 %v364
      %1004 = vmatpush.msra.mxu0 %v363
      %1005 = vmatpush.msra.mxu0 %v362
      %1006 = vmatpush.msra.mxu0 %v361
      %1007 = vmatpush.msra.mxu0 %v360
      %1008 = vmatpush.msra.mxu0 %v359
      %1009 = vmatpush.msra.mxu0 %v358
      %1010 = vmatpush.msra.mxu0 %v357
      %1011 = vmatmul.f32.gmra.mxu0 %v933
      %v1012 = vpop.f32.mrf.mxu0
      %v1013 = vadd.f32 %v993, %v1012
      %1014 = vdwg.mxu0
      %v1016 = vsel %vm548, %v1013, 0
      %1018 = vmatpush.msra.mxu0 0.0
      %1019 = vmatpush.msra.mxu0 0.0
      %1020 = vmatpush.msra.mxu0 0.0
      %1021 = vmatpush.msra.mxu0 0.0
      %1022 = vmatpush.msra.mxu0 0.0
      %1023 = vmatpush.msra.mxu0 0.0
      %1024 = vmatpush.msra.mxu0 0.0
      %1025 = vmatpush.msra.mxu0 0.0
      %1026 = vmatpush.msra.mxu0 0.0
      %1027 = vmatpush.msra.mxu0 0.0
      %1028 = vmatpush.msra.mxu0 0.0
      %1029 = vmatpush.msra.mxu0 0.0
      %1030 = vmatpush.msra.mxu0 0.0
      %1031 = vmatpush.msra.mxu0 0.0
      %1032 = vmatpush.msra.mxu0 %v377
      %1033 = vmatpush.msra.mxu0 %v373
      %1034 = vmatmul.f32.gmra.mxu0 %v1016
      %v1035 = vpop.f32.mrf.mxu0
      %v1036 = vadd.f32 0.0, %v1035
      %1037 = vdwg.mxu0
      %1038 = vmatpush.msra.mxu0 0.0
      %1039 = vmatpush.msra.mxu0 0.0
      %1040 = vmatpush.msra.mxu0 0.0
      %1041 = vmatpush.msra.mxu0 0.0
      %1042 = vmatpush.msra.mxu0 0.0
      %1043 = vmatpush.msra.mxu0 0.0
      %1044 = vmatpush.msra.mxu0 0.0
      %1045 = vmatpush.msra.mxu0 0.0
      %1046 = vmatpush.msra.mxu0 0.0
      %1047 = vmatpush.msra.mxu0 0.0
      %1048 = vmatpush.msra.mxu0 0.0
      %1049 = vmatpush.msra.mxu0 0.0
      %1050 = vmatpush.msra.mxu0 0.0
      %1051 = vmatpush.msra.mxu0 0.0
      %1052 = vmatpush.msra.mxu0 %v378
      %1053 = vmatpush.msra.mxu0 %v374
      %1054 = vmatmul.f32.gmra.mxu0 %v1016
      %v1055 = vpop.f32.mrf.mxu0
      %v1056 = vadd.f32 0.0, %v1055
      %1057 = vdwg.mxu0
      %1058 = vmatpush.msra.mxu0 0.0
      %1059 = vmatpush.msra.mxu0 0.0
      %1060 = vmatpush.msra.mxu0 0.0
      %1061 = vmatpush.msra.mxu0 0.0
      %1062 = vmatpush.msra.mxu0 0.0
      %1063 = vmatpush.msra.mxu0 0.0
      %1064 = vmatpush.msra.mxu0 0.0
      %1065 = vmatpush.msra.mxu0 0.0
      %1066 = vmatpush.msra.mxu0 0.0
      %1067 = vmatpush.msra.mxu0 0.0
      %1068 = vmatpush.msra.mxu0 0.0
      %1069 = vmatpush.msra.mxu0 0.0
      %1070 = vmatpush.msra.mxu0 0.0
      %1071 = vmatpush.msra.mxu0 0.0
      %1072 = vmatpush.msra.mxu0 %v379
      %1073 = vmatpush.msra.mxu0 %v375
      %1074 = vmatmul.f32.gmra.mxu0 %v1016
      %v1075 = vpop.f32.mrf.mxu0
      %v1076 = vadd.f32 0.0, %v1075
      %1077 = vdwg.mxu0
      %1078 = vmatpush.msra.mxu0 0.0
      %1079 = vmatpush.msra.mxu0 0.0
      %1080 = vmatpush.msra.mxu0 0.0
      %1081 = vmatpush.msra.mxu0 0.0
      %1082 = vmatpush.msra.mxu0 0.0
      %1083 = vmatpush.msra.mxu0 0.0
      %1084 = vmatpush.msra.mxu0 0.0
      %1085 = vmatpush.msra.mxu0 0.0
      %1086 = vmatpush.msra.mxu0 0.0
      %1087 = vmatpush.msra.mxu0 0.0
      %1088 = vmatpush.msra.mxu0 0.0
      %1089 = vmatpush.msra.mxu0 0.0
      %1090 = vmatpush.msra.mxu0 0.0
      %1091 = vmatpush.msra.mxu0 0.0
      %1092 = vmatpush.msra.mxu0 %v380
      %1093 = vmatpush.msra.mxu0 %v376
      %1094 = vmatmul.f32.gmra.mxu0 %v1016
      %v1095 = vpop.f32.mrf.mxu0
      %v1096 = vadd.f32 0.0, %v1095
      %1097 = vdwg.mxu0
      %v1098 = vsub.f32 %v873, %v1036
      %v1099 = vsub.f32 %v893, %v1056
      %v1100 = vsub.f32 %v913, %v1076
      %v1101 = vsub.f32 %v933, %v1096
      %v1102 = vmul.f32 %v1098, %v1098
      %v1103 = vmul.f32 %v1099, %v1099
      %v1104 = vmul.f32 %v1100, %v1100
      %v1105 = vmul.f32 %v1101, %v1101
      %1106 = vmatpush.msra.mxu0 %v324
      %1107 = vmatpush.msra.mxu0 %v323
      %1108 = vmatpush.msra.mxu0 %v322
      %1109 = vmatpush.msra.mxu0 %v321
      %1110 = vmatpush.msra.mxu0 %v320
      %1111 = vmatpush.msra.mxu0 %v319
      %1112 = vmatpush.msra.mxu0 %v318
      %1113 = vmatpush.msra.mxu0 %v317
      %1114 = vmatpush.msra.mxu0 %v316
      %1115 = vmatpush.msra.mxu0 %v315
      %1116 = vmatpush.msra.mxu0 %v314
      %1117 = vmatpush.msra.mxu0 %v313
      %1118 = vmatpush.msra.mxu0 %v312
      %1119 = vmatpush.msra.mxu0 %v311
      %1120 = vmatpush.msra.mxu0 %v310
      %1121 = vmatpush.msra.mxu0 %v309
      %1122 = vmatmul.f32.gmra.mxu0 %v1102
      %v1123 = vpop.f32.mrf.mxu0
      %v1124 = vadd.f32 1e-05, %v1123
      %1125 = vdwg.mxu0
      %1126 = vmatpush.msra.mxu0 %v340
      %1127 = vmatpush.msra.mxu0 %v339
      %1128 = vmatpush.msra.mxu0 %v338
      %1129 = vmatpush.msra.mxu0 %v337
      %1130 = vmatpush.msra.mxu0 %v336
      %1131 = vmatpush.msra.mxu0 %v335
      %1132 = vmatpush.msra.mxu0 %v334
      %1133 = vmatpush.msra.mxu0 %v333
      %1134 = vmatpush.msra.mxu0 %v332
      %1135 = vmatpush.msra.mxu0 %v331
      %1136 = vmatpush.msra.mxu0 %v330
      %1137 = vmatpush.msra.mxu0 %v329
      %1138 = vmatpush.msra.mxu0 %v328
      %1139 = vmatpush.msra.mxu0 %v327
      %1140 = vmatpush.msra.mxu0 %v326
      %1141 = vmatpush.msra.mxu0 %v325
      %1142 = vmatmul.f32.gmra.mxu0 %v1103
      %v1143 = vpop.f32.mrf.mxu0
      %v1144 = vadd.f32 %v1124, %v1143
      %1145 = vdwg.mxu0
      %1146 = vmatpush.msra.mxu0 %v356
      %1147 = vmatpush.msra.mxu0 %v355
      %1148 = vmatpush.msra.mxu0 %v354
      %1149 = vmatpush.msra.mxu0 %v353
      %1150 = vmatpush.msra.mxu0 %v352
      %1151 = vmatpush.msra.mxu0 %v351
      %1152 = vmatpush.msra.mxu0 %v350
      %1153 = vmatpush.msra.mxu0 %v349
      %1154 = vmatpush.msra.mxu0 %v348
      %1155 = vmatpush.msra.mxu0 %v347
      %1156 = vmatpush.msra.mxu0 %v346
      %1157 = vmatpush.msra.mxu0 %v345
      %1158 = vmatpush.msra.mxu0 %v344
      %1159 = vmatpush.msra.mxu0 %v343
      %1160 = vmatpush.msra.mxu0 %v342
      %1161 = vmatpush.msra.mxu0 %v341
      %1162 = vmatmul.f32.gmra.mxu0 %v1104
      %v1163 = vpop.f32.mrf.mxu0
      %v1164 = vadd.f32 %v1144, %v1163
      %1165 = vdwg.mxu0
      %1166 = vmatpush.msra.mxu0 %v372
      %1167 = vmatpush.msra.mxu0 %v371
      %1168 = vmatpush.msra.mxu0 %v370
      %1169 = vmatpush.msra.mxu0 %v369
      %1170 = vmatpush.msra.mxu0 %v368
      %1171 = vmatpush.msra.mxu0 %v367
      %1172 = vmatpush.msra.mxu0 %v366
      %1173 = vmatpush.msra.mxu0 %v365
      %1174 = vmatpush.msra.mxu0 %v364
      %1175 = vmatpush.msra.mxu0 %v363
      %1176 = vmatpush.msra.mxu0 %v362
      %1177 = vmatpush.msra.mxu0 %v361
      %1178 = vmatpush.msra.mxu0 %v360
      %1179 = vmatpush.msra.mxu0 %v359
      %1180 = vmatpush.msra.mxu0 %v358
      %1181 = vmatpush.msra.mxu0 %v357
      %1182 = vmatmul.f32.gmra.mxu0 %v1105
      %v1183 = vpop.f32.mrf.mxu0
      %v1184 = vadd.f32 %v1164, %v1183
      %1185 = vdwg.mxu0
      %v1186 = vrsqrt.pop %v1184
      %v1187 = vmul.f32 %v1186, %v1184
      %v1188 = vmul.f32 %v1187, %v1186
      %v1189 = vmul.f32 0.5, %v1188
      %v1190 = vsub.f32 1.5, %v1189
      %v1191 = vmul.f32 %v1186, %v1190
      %vm1192 = vweird.f32 %v1184
      %vm1193 = vweird.f32 %v1186
      %vm1194 = vmor %vm1192, %vm1193
      %v1195 = vsel %vm1194, %v1186, %v1191
      %v1197 = vsel %vm548, %v1195, 0
      %1199 = vmatpush.msra.mxu0 0.0
      %1200 = vmatpush.msra.mxu0 0.0
      %1201 = vmatpush.msra.mxu0 0.0
      %1202 = vmatpush.msra.mxu0 0.0
      %1203 = vmatpush.msra.mxu0 0.0
      %1204 = vmatpush.msra.mxu0 0.0
      %1205 = vmatpush.msra.mxu0 0.0
      %1206 = vmatpush.msra.mxu0 0.0
      %1207 = vmatpush.msra.mxu0 0.0
      %1208 = vmatpush.msra.mxu0 0.0
      %1209 = vmatpush.msra.mxu0 0.0
      %1210 = vmatpush.msra.mxu0 0.0
      %1211 = vmatpush.msra.mxu0 0.0
      %1212 = vmatpush.msra.mxu0 0.0
      %1213 = vmatpush.msra.mxu0 %v377
      %1214 = vmatpush.msra.mxu0 %v373
      %1215 = vmatmul.f32.gmra.mxu0 %v1197
      %v1216 = vpop.f32.mrf.mxu0
      %v1217 = vadd.f32 0.0, %v1216
      %1218 = vdwg.mxu0
      %1219 = vmatpush.msra.mxu0 0.0
      %1220 = vmatpush.msra.mxu0 0.0
      %1221 = vmatpush.msra.mxu0 0.0
      %1222 = vmatpush.msra.mxu0 0.0
      %1223 = vmatpush.msra.mxu0 0.0
      %1224 = vmatpush.msra.mxu0 0.0
      %1225 = vmatpush.msra.mxu0 0.0
      %1226 = vmatpush.msra.mxu0 0.0
      %1227 = vmatpush.msra.mxu0 0.0
      %1228 = vmatpush.msra.mxu0 0.0
      %1229 = vmatpush.msra.mxu0 0.0
      %1230 = vmatpush.msra.mxu0 0.0
      %1231 = vmatpush.msra.mxu0 0.0
      %1232 = vmatpush.msra.mxu0 0.0
      %1233 = vmatpush.msra.mxu0 %v378
      %1234 = vmatpush.msra.mxu0 %v374
      %1235 = vmatmul.f32.gmra.mxu0 %v1197
      %v1236 = vpop.f32.mrf.mxu0
      %v1237 = vadd.f32 0.0, %v1236
      %1238 = vdwg.mxu0
      %1239 = vmatpush.msra.mxu0 0.0
      %1240 = vmatpush.msra.mxu0 0.0
      %1241 = vmatpush.msra.mxu0 0.0
      %1242 = vmatpush.msra.mxu0 0.0
      %1243 = vmatpush.msra.mxu0 0.0
      %1244 = vmatpush.msra.mxu0 0.0
      %1245 = vmatpush.msra.mxu0 0.0
      %1246 = vmatpush.msra.mxu0 0.0
      %1247 = vmatpush.msra.mxu0 0.0
      %1248 = vmatpush.msra.mxu0 0.0
      %1249 = vmatpush.msra.mxu0 0.0
      %1250 = vmatpush.msra.mxu0 0.0
      %1251 = vmatpush.msra.mxu0 0.0
      %1252 = vmatpush.msra.mxu0 0.0
      %1253 = vmatpush.msra.mxu0 %v379
      %1254 = vmatpush.msra.mxu0 %v375
      %1255 = vmatmul.f32.gmra.mxu0 %v1197
      %v1256 = vpop.f32.mrf.mxu0
      %v1257 = vadd.f32 0.0, %v1256
      %1258 = vdwg.mxu0
      %1259 = vmatpush.msra.mxu0 0.0
      %1260 = vmatpush.msra.mxu0 0.0
      %1261 = vmatpush.msra.mxu0 0.0
      %1262 = vmatpush.msra.mxu0 0.0
      %1263 = vmatpush.msra.mxu0 0.0
      %1264 = vmatpush.msra.mxu0 0.0
      %1265 = vmatpush.msra.mxu0 0.0
      %1266 = vmatpush.msra.mxu0 0.0
      %1267 = vmatpush.msra.mxu0 0.0
      %1268 = vmatpush.msra.mxu0 0.0
      %1269 = vmatpush.msra.mxu0 0.0
      %1270 = vmatpush.msra.mxu0 0.0
      %1271 = vmatpush.msra.mxu0 0.0
      %1272 = vmatpush.msra.mxu0 0.0
      %1273 = vmatpush.msra.mxu0 %v380
      %1274 = vmatpush.msra.mxu0 %v376
      %1275 = vmatmul.f32.gmra.mxu0 %v1197
      %v1276 = vpop.f32.mrf.mxu0
      %v1277 = vadd.f32 0.0, %v1276
      %1278 = vdwg.mxu0
      %v1279 = vmul.f32 %v1098, %v1217
      %v1280 = vmul.f32 %v1099, %v1237
      %v1281 = vmul.f32 %v1100, %v1257
      %v1282 = vmul.f32 %v1101, %v1277
      %v1283 = vmul.f32 %v1279, %v818
      %v1284 = vmul.f32 %v1280, %v819
      %v1285 = vmul.f32 %v1281, %v820
      %v1286 = vmul.f32 %v1282, %v821
      %v1287 = vadd.f32 %v1283, %v831
      %v1288 = vadd.f32 %v1284, %v832
      %v1289 = vadd.f32 %v1285, %v833
      %v1290 = vadd.f32 %v1286, %v834
      %s1291 = scalar_lea.vmem %s291, 16
      %1292 = vst [vmem:[%s1291] sm:$0xf] %v1287
      %s1293 = scalar_lea.vmem %s291, 20
      %1294 = vst [vmem:[%s1293] sm:$0xf] %v1288
      %s1295 = scalar_lea.vmem %s291, 24
      %1296 = vst [vmem:[%s1295] sm:$0xf] %v1289
      %s1297 = scalar_lea.vmem %s291, 28
      %1298 = vst [vmem:[%s1297] sm:$0xf] %v1290
      %s1299 = scalar_lea.vmem %s280, 8
      %v1300 = vld [vmem:[%s1299] sm:$0xf]
      %v1302 = vsel %vm384, %v1300, 0
      %1304 = vmatpush.msra.mxu0 0.0
      %1305 = vmatpush.msra.mxu0 0.0
      %1306 = vmatpush.msra.mxu0 0.0
      %1307 = vmatpush.msra.mxu0 0.0
      %1308 = vmatpush.msra.mxu0 0.0
      %1309 = vmatpush.msra.mxu0 0.0
      %1310 = vmatpush.msra.mxu0 0.0
      %1311 = vmatpush.msra.mxu0 0.0
      %1312 = vmatpush.msra.mxu0 0.0
      %1313 = vmatpush.msra.mxu0 0.0
      %1314 = vmatpush.msra.mxu0 0.0
      %1315 = vmatpush.msra.mxu0 0.0
      %1316 = vmatpush.msra.mxu0 %v305
      %1317 = vmatpush.msra.mxu0 %v301
      %1318 = vmatpush.msra.mxu0 %v297
      %1319 = vmatpush.msra.mxu0 %v293
      %1320 = vmatmul.f32.gmra.mxu0 %v1302
      %v1321 = vpop.f32.mrf.mxu0
      %v1322 = vadd.f32 0.0, %v1321
      %1323 = vdwg.mxu0
      %1324 = vmatpush.msra.mxu0 0.0
      %1325 = vmatpush.msra.mxu0 0.0
      %1326 = vmatpush.msra.mxu0 0.0
      %1327 = vmatpush.msra.mxu0 0.0
      %1328 = vmatpush.msra.mxu0 0.0
      %1329 = vmatpush.msra.mxu0 0.0
      %1330 = vmatpush.msra.mxu0 0.0
      %1331 = vmatpush.msra.mxu0 0.0
      %1332 = vmatpush.msra.mxu0 0.0
      %1333 = vmatpush.msra.mxu0 0.0
      %1334 = vmatpush.msra.mxu0 0.0
      %1335 = vmatpush.msra.mxu0 0.0
      %1336 = vmatpush.msra.mxu0 %v306
      %1337 = vmatpush.msra.mxu0 %v302
      %1338 = vmatpush.msra.mxu0 %v298
      %1339 = vmatpush.msra.mxu0 %v294
      %1340 = vmatmul.f32.gmra.mxu0 %v1302
      %v1341 = vpop.f32.mrf.mxu0
      %v1342 = vadd.f32 0.0, %v1341
      %1343 = vdwg.mxu0
      %1344 = vmatpush.msra.mxu0 0.0
      %1345 = vmatpush.msra.mxu0 0.0
      %1346 = vmatpush.msra.mxu0 0.0
      %1347 = vmatpush.msra.mxu0 0.0
      %1348 = vmatpush.msra.mxu0 0.0
      %1349 = vmatpush.msra.mxu0 0.0
      %1350 = vmatpush.msra.mxu0 0.0
      %1351 = vmatpush.msra.mxu0 0.0
      %1352 = vmatpush.msra.mxu0 0.0
      %1353 = vmatpush.msra.mxu0 0.0
      %1354 = vmatpush.msra.mxu0 0.0
      %1355 = vmatpush.msra.mxu0 0.0
      %1356 = vmatpush.msra.mxu0 %v307
      %1357 = vmatpush.msra.mxu0 %v303
      %1358 = vmatpush.msra.mxu0 %v299
      %1359 = vmatpush.msra.mxu0 %v295
      %1360 = vmatmul.f32.gmra.mxu0 %v1302
      %v1361 = vpop.f32.mrf.mxu0
      %v1362 = vadd.f32 0.0, %v1361
      %1363 = vdwg.mxu0
      %1364 = vmatpush.msra.mxu0 0.0
      %1365 = vmatpush.msra.mxu0 0.0
      %1366 = vmatpush.msra.mxu0 0.0
      %1367 = vmatpush.msra.mxu0 0.0
      %1368 = vmatpush.msra.mxu0 0.0
      %1369 = vmatpush.msra.mxu0 0.0
      %1370 = vmatpush.msra.mxu0 0.0
      %1371 = vmatpush.msra.mxu0 0.0
      %1372 = vmatpush.msra.mxu0 0.0
      %1373 = vmatpush.msra.mxu0 0.0
      %1374 = vmatpush.msra.mxu0 0.0
      %1375 = vmatpush.msra.mxu0 0.0
      %1376 = vmatpush.msra.mxu0 %v308
      %1377 = vmatpush.msra.mxu0 %v304
      %1378 = vmatpush.msra.mxu0 %v300
      %1379 = vmatpush.msra.mxu0 %v296
      %1380 = vmatmul.f32.gmra.mxu0 %v1302
      %v1381 = vpop.f32.mrf.mxu0
      %v1382 = vadd.f32 0.0, %v1381
      %1383 = vdwg.mxu0
      %1384 = vmatpush.msra.mxu0 %v324
      %1385 = vmatpush.msra.mxu0 %v323
      %1386 = vmatpush.msra.mxu0 %v322
      %1387 = vmatpush.msra.mxu0 %v321
      %1388 = vmatpush.msra.mxu0 %v320
      %1389 = vmatpush.msra.mxu0 %v319
      %1390 = vmatpush.msra.mxu0 %v318
      %1391 = vmatpush.msra.mxu0 %v317
      %1392 = vmatpush.msra.mxu0 %v316
      %1393 = vmatpush.msra.mxu0 %v315
      %1394 = vmatpush.msra.mxu0 %v314
      %1395 = vmatpush.msra.mxu0 %v313
      %1396 = vmatpush.msra.mxu0 %v312
      %1397 = vmatpush.msra.mxu0 %v311
      %1398 = vmatpush.msra.mxu0 %v310
      %1399 = vmatpush.msra.mxu0 %v309
      %1400 = vmatmul.f32.gmra.mxu0 %v1322
      %v1401 = vpop.f32.mrf.mxu0
      %v1402 = vadd.f32 0.0, %v1401
      %1403 = vdwg.mxu0
      %1404 = vmatpush.msra.mxu0 %v340
      %1405 = vmatpush.msra.mxu0 %v339
      %1406 = vmatpush.msra.mxu0 %v338
      %1407 = vmatpush.msra.mxu0 %v337
      %1408 = vmatpush.msra.mxu0 %v336
      %1409 = vmatpush.msra.mxu0 %v335
      %1410 = vmatpush.msra.mxu0 %v334
      %1411 = vmatpush.msra.mxu0 %v333
      %1412 = vmatpush.msra.mxu0 %v332
      %1413 = vmatpush.msra.mxu0 %v331
      %1414 = vmatpush.msra.mxu0 %v330
      %1415 = vmatpush.msra.mxu0 %v329
      %1416 = vmatpush.msra.mxu0 %v328
      %1417 = vmatpush.msra.mxu0 %v327
      %1418 = vmatpush.msra.mxu0 %v326
      %1419 = vmatpush.msra.mxu0 %v325
      %1420 = vmatmul.f32.gmra.mxu0 %v1342
      %v1421 = vpop.f32.mrf.mxu0
      %v1422 = vadd.f32 %v1402, %v1421
      %1423 = vdwg.mxu0
      %1424 = vmatpush.msra.mxu0 %v356
      %1425 = vmatpush.msra.mxu0 %v355
      %1426 = vmatpush.msra.mxu0 %v354
      %1427 = vmatpush.msra.mxu0 %v353
      %1428 = vmatpush.msra.mxu0 %v352
      %1429 = vmatpush.msra.mxu0 %v351
      %1430 = vmatpush.msra.mxu0 %v350
      %1431 = vmatpush.msra.mxu0 %v349
      %1432 = vmatpush.msra.mxu0 %v348
      %1433 = vmatpush.msra.mxu0 %v347
      %1434 = vmatpush.msra.mxu0 %v346
      %1435 = vmatpush.msra.mxu0 %v345
      %1436 = vmatpush.msra.mxu0 %v344
      %1437 = vmatpush.msra.mxu0 %v343
      %1438 = vmatpush.msra.mxu0 %v342
      %1439 = vmatpush.msra.mxu0 %v341
      %1440 = vmatmul.f32.gmra.mxu0 %v1362
      %v1441 = vpop.f32.mrf.mxu0
      %v1442 = vadd.f32 %v1422, %v1441
      %1443 = vdwg.mxu0
      %1444 = vmatpush.msra.mxu0 %v372
      %1445 = vmatpush.msra.mxu0 %v371
      %1446 = vmatpush.msra.mxu0 %v370
      %1447 = vmatpush.msra.mxu0 %v369
      %1448 = vmatpush.msra.mxu0 %v368
      %1449 = vmatpush.msra.mxu0 %v367
      %1450 = vmatpush.msra.mxu0 %v366
      %1451 = vmatpush.msra.mxu0 %v365
      %1452 = vmatpush.msra.mxu0 %v364
      %1453 = vmatpush.msra.mxu0 %v363
      %1454 = vmatpush.msra.mxu0 %v362
      %1455 = vmatpush.msra.mxu0 %v361
      %1456 = vmatpush.msra.mxu0 %v360
      %1457 = vmatpush.msra.mxu0 %v359
      %1458 = vmatpush.msra.mxu0 %v358
      %1459 = vmatpush.msra.mxu0 %v357
      %1460 = vmatmul.f32.gmra.mxu0 %v1382
      %v1461 = vpop.f32.mrf.mxu0
      %v1462 = vadd.f32 %v1442, %v1461
      %1463 = vdwg.mxu0
      %v1465 = vsel %vm548, %v1462, 0
      %1467 = vmatpush.msra.mxu0 0.0
      %1468 = vmatpush.msra.mxu0 0.0
      %1469 = vmatpush.msra.mxu0 0.0
      %1470 = vmatpush.msra.mxu0 0.0
      %1471 = vmatpush.msra.mxu0 0.0
      %1472 = vmatpush.msra.mxu0 0.0
      %1473 = vmatpush.msra.mxu0 0.0
      %1474 = vmatpush.msra.mxu0 0.0
      %1475 = vmatpush.msra.mxu0 0.0
      %1476 = vmatpush.msra.mxu0 0.0
      %1477 = vmatpush.msra.mxu0 0.0
      %1478 = vmatpush.msra.mxu0 0.0
      %1479 = vmatpush.msra.mxu0 0.0
      %1480 = vmatpush.msra.mxu0 0.0
      %1481 = vmatpush.msra.mxu0 %v377
      %1482 = vmatpush.msra.mxu0 %v373
      %1483 = vmatmul.f32.gmra.mxu0 %v1465
      %v1484 = vpop.f32.mrf.mxu0
      %v1485 = vadd.f32 0.0, %v1484
      %1486 = vdwg.mxu0
      %1487 = vmatpush.msra.mxu0 0.0
      %1488 = vmatpush.msra.mxu0 0.0
      %1489 = vmatpush.msra.mxu0 0.0
      %1490 = vmatpush.msra.mxu0 0.0
      %1491 = vmatpush.msra.mxu0 0.0
      %1492 = vmatpush.msra.mxu0 0.0
      %1493 = vmatpush.msra.mxu0 0.0
      %1494 = vmatpush.msra.mxu0 0.0
      %1495 = vmatpush.msra.mxu0 0.0
      %1496 = vmatpush.msra.mxu0 0.0
      %1497 = vmatpush.msra.mxu0 0.0
      %1498 = vmatpush.msra.mxu0 0.0
      %1499 = vmatpush.msra.mxu0 0.0
      %1500 = vmatpush.msra.mxu0 0.0
      %1501 = vmatpush.msra.mxu0 %v378
      %1502 = vmatpush.msra.mxu0 %v374
      %1503 = vmatmul.f32.gmra.mxu0 %v1465
      %v1504 = vpop.f32.mrf.mxu0
      %v1505 = vadd.f32 0.0, %v1504
      %1506 = vdwg.mxu0
      %1507 = vmatpush.msra.mxu0 0.0
      %1508 = vmatpush.msra.mxu0 0.0
      %1509 = vmatpush.msra.mxu0 0.0
      %1510 = vmatpush.msra.mxu0 0.0
      %1511 = vmatpush.msra.mxu0 0.0
      %1512 = vmatpush.msra.mxu0 0.0
      %1513 = vmatpush.msra.mxu0 0.0
      %1514 = vmatpush.msra.mxu0 0.0
      %1515 = vmatpush.msra.mxu0 0.0
      %1516 = vmatpush.msra.mxu0 0.0
      %1517 = vmatpush.msra.mxu0 0.0
      %1518 = vmatpush.msra.mxu0 0.0
      %1519 = vmatpush.msra.mxu0 0.0
      %1520 = vmatpush.msra.mxu0 0.0
      %1521 = vmatpush.msra.mxu0 %v379
      %1522 = vmatpush.msra.mxu0 %v375
      %1523 = vmatmul.f32.gmra.mxu0 %v1465
      %v1524 = vpop.f32.mrf.mxu0
      %v1525 = vadd.f32 0.0, %v1524
      %1526 = vdwg.mxu0
      %1527 = vmatpush.msra.mxu0 0.0
      %1528 = vmatpush.msra.mxu0 0.0
      %1529 = vmatpush.msra.mxu0 0.0
      %1530 = vmatpush.msra.mxu0 0.0
      %1531 = vmatpush.msra.mxu0 0.0
      %1532 = vmatpush.msra.mxu0 0.0
      %1533 = vmatpush.msra.mxu0 0.0
      %1534 = vmatpush.msra.mxu0 0.0
      %1535 = vmatpush.msra.mxu0 0.0
      %1536 = vmatpush.msra.mxu0 0.0
      %1537 = vmatpush.msra.mxu0 0.0
      %1538 = vmatpush.msra.mxu0 0.0
      %1539 = vmatpush.msra.mxu0 0.0
      %1540 = vmatpush.msra.mxu0 0.0
      %1541 = vmatpush.msra.mxu0 %v380
      %1542 = vmatpush.msra.mxu0 %v376
      %1543 = vmatmul.f32.gmra.mxu0 %v1465
      %v1544 = vpop.f32.mrf.mxu0
      %v1545 = vadd.f32 0.0, %v1544
      %1546 = vdwg.mxu0
      %v1547 = vsub.f32 %v1322, %v1485
      %v1548 = vsub.f32 %v1342, %v1505
      %v1549 = vsub.f32 %v1362, %v1525
      %v1550 = vsub.f32 %v1382, %v1545
      %v1551 = vmul.f32 %v1547, %v1547
      %v1552 = vmul.f32 %v1548, %v1548
      %v1553 = vmul.f32 %v1549, %v1549
      %v1554 = vmul.f32 %v1550, %v1550
      %1555 = vmatpush.msra.mxu0 %v324
      %1556 = vmatpush.msra.mxu0 %v323
      %1557 = vmatpush.msra.mxu0 %v322
      %1558 = vmatpush.msra.mxu0 %v321
      %1559 = vmatpush.msra.mxu0 %v320
      %1560 = vmatpush.msra.mxu0 %v319
      %1561 = vmatpush.msra.mxu0 %v318
      %1562 = vmatpush.msra.mxu0 %v317
      %1563 = vmatpush.msra.mxu0 %v316
      %1564 = vmatpush.msra.mxu0 %v315
      %1565 = vmatpush.msra.mxu0 %v314
      %1566 = vmatpush.msra.mxu0 %v313
      %1567 = vmatpush.msra.mxu0 %v312
      %1568 = vmatpush.msra.mxu0 %v311
      %1569 = vmatpush.msra.mxu0 %v310
      %1570 = vmatpush.msra.mxu0 %v309
      %1571 = vmatmul.f32.gmra.mxu0 %v1551
      %v1572 = vpop.f32.mrf.mxu0
      %v1573 = vadd.f32 1e-05, %v1572
      %1574 = vdwg.mxu0
      %1575 = vmatpush.msra.mxu0 %v340
      %1576 = vmatpush.msra.mxu0 %v339
      %1577 = vmatpush.msra.mxu0 %v338
      %1578 = vmatpush.msra.mxu0 %v337
      %1579 = vmatpush.msra.mxu0 %v336
      %1580 = vmatpush.msra.mxu0 %v335
      %1581 = vmatpush.msra.mxu0 %v334
      %1582 = vmatpush.msra.mxu0 %v333
      %1583 = vmatpush.msra.mxu0 %v332
      %1584 = vmatpush.msra.mxu0 %v331
      %1585 = vmatpush.msra.mxu0 %v330
      %1586 = vmatpush.msra.mxu0 %v329
      %1587 = vmatpush.msra.mxu0 %v328
      %1588 = vmatpush.msra.mxu0 %v327
      %1589 = vmatpush.msra.mxu0 %v326
      %1590 = vmatpush.msra.mxu0 %v325
      %1591 = vmatmul.f32.gmra.mxu0 %v1552
      %v1592 = vpop.f32.mrf.mxu0
      %v1593 = vadd.f32 %v1573, %v1592
      %1594 = vdwg.mxu0
      %1595 = vmatpush.msra.mxu0 %v356
      %1596 = vmatpush.msra.mxu0 %v355
      %1597 = vmatpush.msra.mxu0 %v354
      %1598 = vmatpush.msra.mxu0 %v353
      %1599 = vmatpush.msra.mxu0 %v352
      %1600 = vmatpush.msra.mxu0 %v351
      %1601 = vmatpush.msra.mxu0 %v350
      %1602 = vmatpush.msra.mxu0 %v349
      %1603 = vmatpush.msra.mxu0 %v348
      %1604 = vmatpush.msra.mxu0 %v347
      %1605 = vmatpush.msra.mxu0 %v346
      %1606 = vmatpush.msra.mxu0 %v345
      %1607 = vmatpush.msra.mxu0 %v344
      %1608 = vmatpush.msra.mxu0 %v343
      %1609 = vmatpush.msra.mxu0 %v342
      %1610 = vmatpush.msra.mxu0 %v341
      %1611 = vmatmul.f32.gmra.mxu0 %v1553
      %v1612 = vpop.f32.mrf.mxu0
      %v1613 = vadd.f32 %v1593, %v1612
      %1614 = vdwg.mxu0
      %1615 = vmatpush.msra.mxu0 %v372
      %1616 = vmatpush.msra.mxu0 %v371
      %1617 = vmatpush.msra.mxu0 %v370
      %1618 = vmatpush.msra.mxu0 %v369
      %1619 = vmatpush.msra.mxu0 %v368
      %1620 = vmatpush.msra.mxu0 %v367
      %1621 = vmatpush.msra.mxu0 %v366
      %1622 = vmatpush.msra.mxu0 %v365
      %1623 = vmatpush.msra.mxu0 %v364
      %1624 = vmatpush.msra.mxu0 %v363
      %1625 = vmatpush.msra.mxu0 %v362
      %1626 = vmatpush.msra.mxu0 %v361
      %1627 = vmatpush.msra.mxu0 %v360
      %1628 = vmatpush.msra.mxu0 %v359
      %1629 = vmatpush.msra.mxu0 %v358
      %1630 = vmatpush.msra.mxu0 %v357
      %1631 = vmatmul.f32.gmra.mxu0 %v1554
      %v1632 = vpop.f32.mrf.mxu0
      %v1633 = vadd.f32 %v1613, %v1632
      %1634 = vdwg.mxu0
      %v1635 = vrsqrt.pop %v1633
      %v1636 = vmul.f32 %v1635, %v1633
      %v1637 = vmul.f32 %v1636, %v1635
      %v1638 = vmul.f32 0.5, %v1637
      %v1639 = vsub.f32 1.5, %v1638
      %v1640 = vmul.f32 %v1635, %v1639
      %vm1641 = vweird.f32 %v1633
      %vm1642 = vweird.f32 %v1635
      %vm1643 = vmor %vm1641, %vm1642
      %v1644 = vsel %vm1643, %v1635, %v1640
      %v1646 = vsel %vm548, %v1644, 0
      %1648 = vmatpush.msra.mxu0 0.0
      %1649 = vmatpush.msra.mxu0 0.0
      %1650 = vmatpush.msra.mxu0 0.0
      %1651 = vmatpush.msra.mxu0 0.0
      %1652 = vmatpush.msra.mxu0 0.0
      %1653 = vmatpush.msra.mxu0 0.0
      %1654 = vmatpush.msra.mxu0 0.0
      %1655 = vmatpush.msra.mxu0 0.0
      %1656 = vmatpush.msra.mxu0 0.0
      %1657 = vmatpush.msra.mxu0 0.0
      %1658 = vmatpush.msra.mxu0 0.0
      %1659 = vmatpush.msra.mxu0 0.0
      %1660 = vmatpush.msra.mxu0 0.0
      %1661 = vmatpush.msra.mxu0 0.0
      %1662 = vmatpush.msra.mxu0 %v377
      %1663 = vmatpush.msra.mxu0 %v373
      %1664 = vmatmul.f32.gmra.mxu0 %v1646
      %v1665 = vpop.f32.mrf.mxu0
      %v1666 = vadd.f32 0.0, %v1665
      %1667 = vdwg.mxu0
      %1668 = vmatpush.msra.mxu0 0.0
      %1669 = vmatpush.msra.mxu0 0.0
      %1670 = vmatpush.msra.mxu0 0.0
      %1671 = vmatpush.msra.mxu0 0.0
      %1672 = vmatpush.msra.mxu0 0.0
      %1673 = vmatpush.msra.mxu0 0.0
      %1674 = vmatpush.msra.mxu0 0.0
      %1675 = vmatpush.msra.mxu0 0.0
      %1676 = vmatpush.msra.mxu0 0.0
      %1677 = vmatpush.msra.mxu0 0.0
      %1678 = vmatpush.msra.mxu0 0.0
      %1679 = vmatpush.msra.mxu0 0.0
      %1680 = vmatpush.msra.mxu0 0.0
      %1681 = vmatpush.msra.mxu0 0.0
      %1682 = vmatpush.msra.mxu0 %v378
      %1683 = vmatpush.msra.mxu0 %v374
      %1684 = vmatmul.f32.gmra.mxu0 %v1646
      %v1685 = vpop.f32.mrf.mxu0
      %v1686 = vadd.f32 0.0, %v1685
      %1687 = vdwg.mxu0
      %1688 = vmatpush.msra.mxu0 0.0
      %1689 = vmatpush.msra.mxu0 0.0
      %1690 = vmatpush.msra.mxu0 0.0
      %1691 = vmatpush.msra.mxu0 0.0
      %1692 = vmatpush.msra.mxu0 0.0
      %1693 = vmatpush.msra.mxu0 0.0
      %1694 = vmatpush.msra.mxu0 0.0
      %1695 = vmatpush.msra.mxu0 0.0
      %1696 = vmatpush.msra.mxu0 0.0
      %1697 = vmatpush.msra.mxu0 0.0
      %1698 = vmatpush.msra.mxu0 0.0
      %1699 = vmatpush.msra.mxu0 0.0
      %1700 = vmatpush.msra.mxu0 0.0
      %1701 = vmatpush.msra.mxu0 0.0
      %1702 = vmatpush.msra.mxu0 %v379
      %1703 = vmatpush.msra.mxu0 %v375
      %1704 = vmatmul.f32.gmra.mxu0 %v1646
      %v1705 = vpop.f32.mrf.mxu0
      %v1706 = vadd.f32 0.0, %v1705
      %1707 = vdwg.mxu0
      %1708 = vmatpush.msra.mxu0 0.0
      %1709 = vmatpush.msra.mxu0 0.0
      %1710 = vmatpush.msra.mxu0 0.0
      %1711 = vmatpush.msra.mxu0 0.0
      %1712 = vmatpush.msra.mxu0 0.0
      %1713 = vmatpush.msra.mxu0 0.0
      %1714 = vmatpush.msra.mxu0 0.0
      %1715 = vmatpush.msra.mxu0 0.0
      %1716 = vmatpush.msra.mxu0 0.0
      %1717 = vmatpush.msra.mxu0 0.0
      %1718 = vmatpush.msra.mxu0 0.0
      %1719 = vmatpush.msra.mxu0 0.0
      %1720 = vmatpush.msra.mxu0 0.0
      %1721 = vmatpush.msra.mxu0 0.0
      %1722 = vmatpush.msra.mxu0 %v380
      %1723 = vmatpush.msra.mxu0 %v376
      %1724 = vmatmul.f32.gmra.mxu0 %v1646
      %v1725 = vpop.f32.mrf.mxu0
      %v1726 = vadd.f32 0.0, %v1725
      %1727 = vdwg.mxu0
      %v1728 = vmul.f32 %v1547, %v1666
      %v1729 = vmul.f32 %v1548, %v1686
      %v1730 = vmul.f32 %v1549, %v1706
      %v1731 = vmul.f32 %v1550, %v1726
      %v1732 = vmul.f32 %v1728, %v818
      %v1733 = vmul.f32 %v1729, %v819
      %v1734 = vmul.f32 %v1730, %v820
      %v1735 = vmul.f32 %v1731, %v821
      %v1736 = vadd.f32 %v1732, %v831
      %v1737 = vadd.f32 %v1733, %v832
      %v1738 = vadd.f32 %v1734, %v833
      %v1739 = vadd.f32 %v1735, %v834
      %s1740 = scalar_lea.vmem %s291, 32
      %1741 = vst [vmem:[%s1740] sm:$0xf] %v1736
      %s1742 = scalar_lea.vmem %s291, 36
      %1743 = vst [vmem:[%s1742] sm:$0xf] %v1737
      %s1744 = scalar_lea.vmem %s291, 40
      %1745 = vst [vmem:[%s1744] sm:$0xf] %v1738
      %s1746 = scalar_lea.vmem %s291, 44
      %1747 = vst [vmem:[%s1746] sm:$0xf] %v1739
      %s1748 = scalar_lea.vmem %s280, 12
      %v1749 = vld [vmem:[%s1748] sm:$0xf]
      %v1751 = vsel %vm384, %v1749, 0
      %1753 = vmatpush.msra.mxu0 0.0
      %1754 = vmatpush.msra.mxu0 0.0
      %1755 = vmatpush.msra.mxu0 0.0
      %1756 = vmatpush.msra.mxu0 0.0
      %1757 = vmatpush.msra.mxu0 0.0
      %1758 = vmatpush.msra.mxu0 0.0
      %1759 = vmatpush.msra.mxu0 0.0
      %1760 = vmatpush.msra.mxu0 0.0
      %1761 = vmatpush.msra.mxu0 0.0
      %1762 = vmatpush.msra.mxu0 0.0
      %1763 = vmatpush.msra.mxu0 0.0
      %1764 = vmatpush.msra.mxu0 0.0
      %1765 = vmatpush.msra.mxu0 %v305
      %1766 = vmatpush.msra.mxu0 %v301
      %1767 = vmatpush.msra.mxu0 %v297
      %1768 = vmatpush.msra.mxu0 %v293
      %1769 = vmatmul.f32.gmra.mxu0 %v1751
      %v1770 = vpop.f32.mrf.mxu0
      %v1771 = vadd.f32 0.0, %v1770
      %1772 = vdwg.mxu0
      %1773 = vmatpush.msra.mxu0 0.0
      %1774 = vmatpush.msra.mxu0 0.0
      %1775 = vmatpush.msra.mxu0 0.0
      %1776 = vmatpush.msra.mxu0 0.0
      %1777 = vmatpush.msra.mxu0 0.0
      %1778 = vmatpush.msra.mxu0 0.0
      %1779 = vmatpush.msra.mxu0 0.0
      %1780 = vmatpush.msra.mxu0 0.0
      %1781 = vmatpush.msra.mxu0 0.0
      %1782 = vmatpush.msra.mxu0 0.0
      %1783 = vmatpush.msra.mxu0 0.0
      %1784 = vmatpush.msra.mxu0 0.0
      %1785 = vmatpush.msra.mxu0 %v306
      %1786 = vmatpush.msra.mxu0 %v302
      %1787 = vmatpush.msra.mxu0 %v298
      %1788 = vmatpush.msra.mxu0 %v294
      %1789 = vmatmul.f32.gmra.mxu0 %v1751
      %v1790 = vpop.f32.mrf.mxu0
      %v1791 = vadd.f32 0.0, %v1790
      %1792 = vdwg.mxu0
      %1793 = vmatpush.msra.mxu0 0.0
      %1794 = vmatpush.msra.mxu0 0.0
      %1795 = vmatpush.msra.mxu0 0.0
      %1796 = vmatpush.msra.mxu0 0.0
      %1797 = vmatpush.msra.mxu0 0.0
      %1798 = vmatpush.msra.mxu0 0.0
      %1799 = vmatpush.msra.mxu0 0.0
      %1800 = vmatpush.msra.mxu0 0.0
      %1801 = vmatpush.msra.mxu0 0.0
      %1802 = vmatpush.msra.mxu0 0.0
      %1803 = vmatpush.msra.mxu0 0.0
      %1804 = vmatpush.msra.mxu0 0.0
      %1805 = vmatpush.msra.mxu0 %v307
      %1806 = vmatpush.msra.mxu0 %v303
      %1807 = vmatpush.msra.mxu0 %v299
      %1808 = vmatpush.msra.mxu0 %v295
      %1809 = vmatmul.f32.gmra.mxu0 %v1751
      %v1810 = vpop.f32.mrf.mxu0
      %v1811 = vadd.f32 0.0, %v1810
      %1812 = vdwg.mxu0
      %1813 = vmatpush.msra.mxu0 0.0
      %1814 = vmatpush.msra.mxu0 0.0
      %1815 = vmatpush.msra.mxu0 0.0
      %1816 = vmatpush.msra.mxu0 0.0
      %1817 = vmatpush.msra.mxu0 0.0
      %1818 = vmatpush.msra.mxu0 0.0
      %1819 = vmatpush.msra.mxu0 0.0
      %1820 = vmatpush.msra.mxu0 0.0
      %1821 = vmatpush.msra.mxu0 0.0
      %1822 = vmatpush.msra.mxu0 0.0
      %1823 = vmatpush.msra.mxu0 0.0
      %1824 = vmatpush.msra.mxu0 0.0
      %1825 = vmatpush.msra.mxu0 %v308
      %1826 = vmatpush.msra.mxu0 %v304
      %1827 = vmatpush.msra.mxu0 %v300
      %1828 = vmatpush.msra.mxu0 %v296
      %1829 = vmatmul.f32.gmra.mxu0 %v1751
      %v1830 = vpop.f32.mrf.mxu0
      %v1831 = vadd.f32 0.0, %v1830
      %1832 = vdwg.mxu0
      %1833 = vmatpush.msra.mxu0 %v324
      %1834 = vmatpush.msra.mxu0 %v323
      %1835 = vmatpush.msra.mxu0 %v322
      %1836 = vmatpush.msra.mxu0 %v321
      %1837 = vmatpush.msra.mxu0 %v320
      %1838 = vmatpush.msra.mxu0 %v319
      %1839 = vmatpush.msra.mxu0 %v318
      %1840 = vmatpush.msra.mxu0 %v317
      %1841 = vmatpush.msra.mxu0 %v316
      %1842 = vmatpush.msra.mxu0 %v315
      %1843 = vmatpush.msra.mxu0 %v314
      %1844 = vmatpush.msra.mxu0 %v313
      %1845 = vmatpush.msra.mxu0 %v312
      %1846 = vmatpush.msra.mxu0 %v311
      %1847 = vmatpush.msra.mxu0 %v310
      %1848 = vmatpush.msra.mxu0 %v309
      %1849 = vmatmul.f32.gmra.mxu0 %v1771
      %v1850 = vpop.f32.mrf.mxu0
      %v1851 = vadd.f32 0.0, %v1850
      %1852 = vdwg.mxu0
      %1853 = vmatpush.msra.mxu0 %v340
      %1854 = vmatpush.msra.mxu0 %v339
      %1855 = vmatpush.msra.mxu0 %v338
      %1856 = vmatpush.msra.mxu0 %v337
      %1857 = vmatpush.msra.mxu0 %v336
      %1858 = vmatpush.msra.mxu0 %v335
      %1859 = vmatpush.msra.mxu0 %v334
      %1860 = vmatpush.msra.mxu0 %v333
      %1861 = vmatpush.msra.mxu0 %v332
      %1862 = vmatpush.msra.mxu0 %v331
      %1863 = vmatpush.msra.mxu0 %v330
      %1864 = vmatpush.msra.mxu0 %v329
      %1865 = vmatpush.msra.mxu0 %v328
      %1866 = vmatpush.msra.mxu0 %v327
      %1867 = vmatpush.msra.mxu0 %v326
      %1868 = vmatpush.msra.mxu0 %v325
      %1869 = vmatmul.f32.gmra.mxu0 %v1791
      %v1870 = vpop.f32.mrf.mxu0
      %v1871 = vadd.f32 %v1851, %v1870
      %1872 = vdwg.mxu0
      %1873 = vmatpush.msra.mxu0 %v356
      %1874 = vmatpush.msra.mxu0 %v355
      %1875 = vmatpush.msra.mxu0 %v354
      %1876 = vmatpush.msra.mxu0 %v353
      %1877 = vmatpush.msra.mxu0 %v352
      %1878 = vmatpush.msra.mxu0 %v351
      %1879 = vmatpush.msra.mxu0 %v350
      %1880 = vmatpush.msra.mxu0 %v349
      %1881 = vmatpush.msra.mxu0 %v348
      %1882 = vmatpush.msra.mxu0 %v347
      %1883 = vmatpush.msra.mxu0 %v346
      %1884 = vmatpush.msra.mxu0 %v345
      %1885 = vmatpush.msra.mxu0 %v344
      %1886 = vmatpush.msra.mxu0 %v343
      %1887 = vmatpush.msra.mxu0 %v342
      %1888 = vmatpush.msra.mxu0 %v341
      %1889 = vmatmul.f32.gmra.mxu0 %v1811
      %v1890 = vpop.f32.mrf.mxu0
      %v1891 = vadd.f32 %v1871, %v1890
      %1892 = vdwg.mxu0
      %1893 = vmatpush.msra.mxu0 %v372
      %1894 = vmatpush.msra.mxu0 %v371
      %1895 = vmatpush.msra.mxu0 %v370
      %1896 = vmatpush.msra.mxu0 %v369
      %1897 = vmatpush.msra.mxu0 %v368
      %1898 = vmatpush.msra.mxu0 %v367
      %1899 = vmatpush.msra.mxu0 %v366
      %1900 = vmatpush.msra.mxu0 %v365
      %1901 = vmatpush.msra.mxu0 %v364
      %1902 = vmatpush.msra.mxu0 %v363
      %1903 = vmatpush.msra.mxu0 %v362
      %1904 = vmatpush.msra.mxu0 %v361
      %1905 = vmatpush.msra.mxu0 %v360
      %1906 = vmatpush.msra.mxu0 %v359
      %1907 = vmatpush.msra.mxu0 %v358
      %1908 = vmatpush.msra.mxu0 %v357
      %1909 = vmatmul.f32.gmra.mxu0 %v1831
      %v1910 = vpop.f32.mrf.mxu0
      %v1911 = vadd.f32 %v1891, %v1910
      %1912 = vdwg.mxu0
      %v1914 = vsel %vm548, %v1911, 0
      %1916 = vmatpush.msra.mxu0 0.0
      %1917 = vmatpush.msra.mxu0 0.0
      %1918 = vmatpush.msra.mxu0 0.0
      %1919 = vmatpush.msra.mxu0 0.0
      %1920 = vmatpush.msra.mxu0 0.0
      %1921 = vmatpush.msra.mxu0 0.0
      %1922 = vmatpush.msra.mxu0 0.0
      %1923 = vmatpush.msra.mxu0 0.0
      %1924 = vmatpush.msra.mxu0 0.0
      %1925 = vmatpush.msra.mxu0 0.0
      %1926 = vmatpush.msra.mxu0 0.0
      %1927 = vmatpush.msra.mxu0 0.0
      %1928 = vmatpush.msra.mxu0 0.0
      %1929 = vmatpush.msra.mxu0 0.0
      %1930 = vmatpush.msra.mxu0 %v377
      %1931 = vmatpush.msra.mxu0 %v373
      %1932 = vmatmul.f32.gmra.mxu0 %v1914
      %v1933 = vpop.f32.mrf.mxu0
      %v1934 = vadd.f32 0.0, %v1933
      %1935 = vdwg.mxu0
      %1936 = vmatpush.msra.mxu0 0.0
      %1937 = vmatpush.msra.mxu0 0.0
      %1938 = vmatpush.msra.mxu0 0.0
      %1939 = vmatpush.msra.mxu0 0.0
      %1940 = vmatpush.msra.mxu0 0.0
      %1941 = vmatpush.msra.mxu0 0.0
      %1942 = vmatpush.msra.mxu0 0.0
      %1943 = vmatpush.msra.mxu0 0.0
      %1944 = vmatpush.msra.mxu0 0.0
      %1945 = vmatpush.msra.mxu0 0.0
      %1946 = vmatpush.msra.mxu0 0.0
      %1947 = vmatpush.msra.mxu0 0.0
      %1948 = vmatpush.msra.mxu0 0.0
      %1949 = vmatpush.msra.mxu0 0.0
      %1950 = vmatpush.msra.mxu0 %v378
      %1951 = vmatpush.msra.mxu0 %v374
      %1952 = vmatmul.f32.gmra.mxu0 %v1914
      %v1953 = vpop.f32.mrf.mxu0
      %v1954 = vadd.f32 0.0, %v1953
      %1955 = vdwg.mxu0
      %1956 = vmatpush.msra.mxu0 0.0
      %1957 = vmatpush.msra.mxu0 0.0
      %1958 = vmatpush.msra.mxu0 0.0
      %1959 = vmatpush.msra.mxu0 0.0
      %1960 = vmatpush.msra.mxu0 0.0
      %1961 = vmatpush.msra.mxu0 0.0
      %1962 = vmatpush.msra.mxu0 0.0
      %1963 = vmatpush.msra.mxu0 0.0
      %1964 = vmatpush.msra.mxu0 0.0
      %1965 = vmatpush.msra.mxu0 0.0
      %1966 = vmatpush.msra.mxu0 0.0
      %1967 = vmatpush.msra.mxu0 0.0
      %1968 = vmatpush.msra.mxu0 0.0
      %1969 = vmatpush.msra.mxu0 0.0
      %1970 = vmatpush.msra.mxu0 %v379
      %1971 = vmatpush.msra.mxu0 %v375
      %1972 = vmatmul.f32.gmra.mxu0 %v1914
      %v1973 = vpop.f32.mrf.mxu0
      %v1974 = vadd.f32 0.0, %v1973
      %1975 = vdwg.mxu0
      %1976 = vmatpush.msra.mxu0 0.0
      %1977 = vmatpush.msra.mxu0 0.0
      %1978 = vmatpush.msra.mxu0 0.0
      %1979 = vmatpush.msra.mxu0 0.0
      %1980 = vmatpush.msra.mxu0 0.0
      %1981 = vmatpush.msra.mxu0 0.0
      %1982 = vmatpush.msra.mxu0 0.0
      %1983 = vmatpush.msra.mxu0 0.0
      %1984 = vmatpush.msra.mxu0 0.0
      %1985 = vmatpush.msra.mxu0 0.0
      %1986 = vmatpush.msra.mxu0 0.0
      %1987 = vmatpush.msra.mxu0 0.0
      %1988 = vmatpush.msra.mxu0 0.0
      %1989 = vmatpush.msra.mxu0 0.0
      %1990 = vmatpush.msra.mxu0 %v380
      %1991 = vmatpush.msra.mxu0 %v376
      %1992 = vmatmul.f32.gmra.mxu0 %v1914
      %v1993 = vpop.f32.mrf.mxu0
      %v1994 = vadd.f32 0.0, %v1993
      %1995 = vdwg.mxu0
      %v1996 = vsub.f32 %v1771, %v1934
      %v1997 = vsub.f32 %v1791, %v1954
      %v1998 = vsub.f32 %v1811, %v1974
      %v1999 = vsub.f32 %v1831, %v1994
      %v2000 = vmul.f32 %v1996, %v1996
      %v2001 = vmul.f32 %v1997, %v1997
      %v2002 = vmul.f32 %v1998, %v1998
      %v2003 = vmul.f32 %v1999, %v1999
      %2004 = vmatpush.msra.mxu0 %v324
      %2005 = vmatpush.msra.mxu0 %v323
      %2006 = vmatpush.msra.mxu0 %v322
      %2007 = vmatpush.msra.mxu0 %v321
      %2008 = vmatpush.msra.mxu0 %v320
      %2009 = vmatpush.msra.mxu0 %v319
      %2010 = vmatpush.msra.mxu0 %v318
      %2011 = vmatpush.msra.mxu0 %v317
      %2012 = vmatpush.msra.mxu0 %v316
      %2013 = vmatpush.msra.mxu0 %v315
      %2014 = vmatpush.msra.mxu0 %v314
      %2015 = vmatpush.msra.mxu0 %v313
      %2016 = vmatpush.msra.mxu0 %v312
      %2017 = vmatpush.msra.mxu0 %v311
      %2018 = vmatpush.msra.mxu0 %v310
      %2019 = vmatpush.msra.mxu0 %v309
      %2020 = vmatmul.f32.gmra.mxu0 %v2000
      %v2021 = vpop.f32.mrf.mxu0
      %v2022 = vadd.f32 1e-05, %v2021
      %2023 = vdwg.mxu0
      %2024 = vmatpush.msra.mxu0 %v340
      %2025 = vmatpush.msra.mxu0 %v339
      %2026 = vmatpush.msra.mxu0 %v338
      %2027 = vmatpush.msra.mxu0 %v337
      %2028 = vmatpush.msra.mxu0 %v336
      %2029 = vmatpush.msra.mxu0 %v335
      %2030 = vmatpush.msra.mxu0 %v334
      %2031 = vmatpush.msra.mxu0 %v333
      %2032 = vmatpush.msra.mxu0 %v332
      %2033 = vmatpush.msra.mxu0 %v331
      %2034 = vmatpush.msra.mxu0 %v330
      %2035 = vmatpush.msra.mxu0 %v329
      %2036 = vmatpush.msra.mxu0 %v328
      %2037 = vmatpush.msra.mxu0 %v327
      %2038 = vmatpush.msra.mxu0 %v326
      %2039 = vmatpush.msra.mxu0 %v325
      %2040 = vmatmul.f32.gmra.mxu0 %v2001
      %v2041 = vpop.f32.mrf.mxu0
      %v2042 = vadd.f32 %v2022, %v2041
      %2043 = vdwg.mxu0
      %2044 = vmatpush.msra.mxu0 %v356
      %2045 = vmatpush.msra.mxu0 %v355
      %2046 = vmatpush.msra.mxu0 %v354
      %2047 = vmatpush.msra.mxu0 %v353
      %2048 = vmatpush.msra.mxu0 %v352
      %2049 = vmatpush.msra.mxu0 %v351
      %2050 = vmatpush.msra.mxu0 %v350
      %2051 = vmatpush.msra.mxu0 %v349
      %2052 = vmatpush.msra.mxu0 %v348
      %2053 = vmatpush.msra.mxu0 %v347
      %2054 = vmatpush.msra.mxu0 %v346
      %2055 = vmatpush.msra.mxu0 %v345
      %2056 = vmatpush.msra.mxu0 %v344
      %2057 = vmatpush.msra.mxu0 %v343
      %2058 = vmatpush.msra.mxu0 %v342
      %2059 = vmatpush.msra.mxu0 %v341
      %2060 = vmatmul.f32.gmra.mxu0 %v2002
      %v2061 = vpop.f32.mrf.mxu0
      %v2062 = vadd.f32 %v2042, %v2061
      %2063 = vdwg.mxu0
      %2064 = vmatpush.msra.mxu0 %v372
      %2065 = vmatpush.msra.mxu0 %v371
      %2066 = vmatpush.msra.mxu0 %v370
      %2067 = vmatpush.msra.mxu0 %v369
      %2068 = vmatpush.msra.mxu0 %v368
      %2069 = vmatpush.msra.mxu0 %v367
      %2070 = vmatpush.msra.mxu0 %v366
      %2071 = vmatpush.msra.mxu0 %v365
      %2072 = vmatpush.msra.mxu0 %v364
      %2073 = vmatpush.msra.mxu0 %v363
      %2074 = vmatpush.msra.mxu0 %v362
      %2075 = vmatpush.msra.mxu0 %v361
      %2076 = vmatpush.msra.mxu0 %v360
      %2077 = vmatpush.msra.mxu0 %v359
      %2078 = vmatpush.msra.mxu0 %v358
      %2079 = vmatpush.msra.mxu0 %v357
      %2080 = vmatmul.f32.gmra.mxu0 %v2003
      %v2081 = vpop.f32.mrf.mxu0
      %v2082 = vadd.f32 %v2062, %v2081
      %2083 = vdwg.mxu0
      %v2084 = vrsqrt.pop %v2082
      %v2085 = vmul.f32 %v2084, %v2082
      %v2086 = vmul.f32 %v2085, %v2084
      %v2087 = vmul.f32 0.5, %v2086
      %v2088 = vsub.f32 1.5, %v2087
      %v2089 = vmul.f32 %v2084, %v2088
      %vm2090 = vweird.f32 %v2082
      %vm2091 = vweird.f32 %v2084
      %vm2092 = vmor %vm2090, %vm2091
      %v2093 = vsel %vm2092, %v2084, %v2089
      %v2095 = vsel %vm548, %v2093, 0
      %2097 = vmatpush.msra.mxu0 0.0
      %2098 = vmatpush.msra.mxu0 0.0
      %2099 = vmatpush.msra.mxu0 0.0
      %2100 = vmatpush.msra.mxu0 0.0
      %2101 = vmatpush.msra.mxu0 0.0
      %2102 = vmatpush.msra.mxu0 0.0
      %2103 = vmatpush.msra.mxu0 0.0
      %2104 = vmatpush.msra.mxu0 0.0
      %2105 = vmatpush.msra.mxu0 0.0
      %2106 = vmatpush.msra.mxu0 0.0
      %2107 = vmatpush.msra.mxu0 0.0
      %2108 = vmatpush.msra.mxu0 0.0
      %2109 = vmatpush.msra.mxu0 0.0
      %2110 = vmatpush.msra.mxu0 0.0
      %2111 = vmatpush.msra.mxu0 %v377
      %2112 = vmatpush.msra.mxu0 %v373
      %2113 = vmatmul.f32.gmra.mxu0 %v2095
      %v2114 = vpop.f32.mrf.mxu0
      %v2115 = vadd.f32 0.0, %v2114
      %2116 = vdwg.mxu0
      %2117 = vmatpush.msra.mxu0 0.0
      %2118 = vmatpush.msra.mxu0 0.0
      %2119 = vmatpush.msra.mxu0 0.0
      %2120 = vmatpush.msra.mxu0 0.0
      %2121 = vmatpush.msra.mxu0 0.0
      %2122 = vmatpush.msra.mxu0 0.0
      %2123 = vmatpush.msra.mxu0 0.0
      %2124 = vmatpush.msra.mxu0 0.0
      %2125 = vmatpush.msra.mxu0 0.0
      %2126 = vmatpush.msra.mxu0 0.0
      %2127 = vmatpush.msra.mxu0 0.0
      %2128 = vmatpush.msra.mxu0 0.0
      %2129 = vmatpush.msra.mxu0 0.0
      %2130 = vmatpush.msra.mxu0 0.0
      %2131 = vmatpush.msra.mxu0 %v378
      %2132 = vmatpush.msra.mxu0 %v374
      %2133 = vmatmul.f32.gmra.mxu0 %v2095
      %v2134 = vpop.f32.mrf.mxu0
      %v2135 = vadd.f32 0.0, %v2134
      %2136 = vdwg.mxu0
      %2137 = vmatpush.msra.mxu0 0.0
      %2138 = vmatpush.msra.mxu0 0.0
      %2139 = vmatpush.msra.mxu0 0.0
      %2140 = vmatpush.msra.mxu0 0.0
      %2141 = vmatpush.msra.mxu0 0.0
      %2142 = vmatpush.msra.mxu0 0.0
      %2143 = vmatpush.msra.mxu0 0.0
      %2144 = vmatpush.msra.mxu0 0.0
      %2145 = vmatpush.msra.mxu0 0.0
      %2146 = vmatpush.msra.mxu0 0.0
      %2147 = vmatpush.msra.mxu0 0.0
      %2148 = vmatpush.msra.mxu0 0.0
      %2149 = vmatpush.msra.mxu0 0.0
      %2150 = vmatpush.msra.mxu0 0.0
      %2151 = vmatpush.msra.mxu0 %v379
      %2152 = vmatpush.msra.mxu0 %v375
      %2153 = vmatmul.f32.gmra.mxu0 %v2095
      %v2154 = vpop.f32.mrf.mxu0
      %v2155 = vadd.f32 0.0, %v2154
      %2156 = vdwg.mxu0
      %2157 = vmatpush.msra.mxu0 0.0
      %2158 = vmatpush.msra.mxu0 0.0
      %2159 = vmatpush.msra.mxu0 0.0
      %2160 = vmatpush.msra.mxu0 0.0
      %2161 = vmatpush.msra.mxu0 0.0
      %2162 = vmatpush.msra.mxu0 0.0
      %2163 = vmatpush.msra.mxu0 0.0
      %2164 = vmatpush.msra.mxu0 0.0
      %2165 = vmatpush.msra.mxu0 0.0
      %2166 = vmatpush.msra.mxu0 0.0
      %2167 = vmatpush.msra.mxu0 0.0
      %2168 = vmatpush.msra.mxu0 0.0
      %2169 = vmatpush.msra.mxu0 0.0
      %2170 = vmatpush.msra.mxu0 0.0
      %2171 = vmatpush.msra.mxu0 %v380
      %2172 = vmatpush.msra.mxu0 %v376
      %2173 = vmatmul.f32.gmra.mxu0 %v2095
      %v2174 = vpop.f32.mrf.mxu0
      %v2175 = vadd.f32 0.0, %v2174
      %2176 = vdwg.mxu0
      %v2177 = vmul.f32 %v1996, %v2115
      %v2178 = vmul.f32 %v1997, %v2135
      %v2179 = vmul.f32 %v1998, %v2155
      %v2180 = vmul.f32 %v1999, %v2175
      %v2181 = vmul.f32 %v2177, %v818
      %v2182 = vmul.f32 %v2178, %v819
      %v2183 = vmul.f32 %v2179, %v820
      %v2184 = vmul.f32 %v2180, %v821
      %v2185 = vadd.f32 %v2181, %v831
      %v2186 = vadd.f32 %v2182, %v832
      %v2187 = vadd.f32 %v2183, %v833
      %v2188 = vadd.f32 %v2184, %v834
      %s2189 = scalar_lea.vmem %s291, 48
      %2190 = vst [vmem:[%s2189] sm:$0xf] %v2185
      %s2191 = scalar_lea.vmem %s291, 52
      %2192 = vst [vmem:[%s2191] sm:$0xf] %v2186
      %s2193 = scalar_lea.vmem %s291, 56
      %2194 = vst [vmem:[%s2193] sm:$0xf] %v2187
      %s2195 = scalar_lea.vmem %s291, 60
      %2196 = vst [vmem:[%s2195] sm:$0xf] %v2188
      %s2197 = smul.u32 4, %s22
      %p2198 = scmp.lt.s32.totalorder %s21, 1
      %s2199 = scalar_select %p2198, %s21, 1
      %p2200 = scmp.lt.s32.totalorder %s2197, 3
      %s2201 = scalar_select %p2200, %s2197, 3
      %s2202 = smul.addr %s2201, 4
      %s2203 = smul.addr %s2199, 16
      %s2204 = sadd.s32 %s2202, %s2203
      %s2205 = smul.addr %s2204, 4
      %s2206 = scalar_lea.vmem %s6, %s2205
      // Predicated region
      $region45: #{final_patch_expand_x4.1} parent=43 // pred_check
        %p2207 = pneg %p182
      $region46: #{final_patch_expand_x4.1} parent=43 // pred_check_branch
        %2209 = sbr.rel (%p2207) target = $region48
      $region47: #{final_patch_expand_x4.1} parent=43 // pred_region
        %s2210 = smul.u32 4, %s22
      $region48: #{final_patch_expand_x4.1} parent=43 // pred_fallthru
        _
    $region44: #{final_patch_expand_x4.1} parent=5 // pred_fallthru
      _
    %p2211 = scmp.le.s32.totalorder 2, %s12
    // Predicated region
    $region49: #{final_patch_expand_x4.1} parent=5 // pred_check
      %p2212 = pneg %p2211
    $region50: #{final_patch_expand_x4.1} parent=5 // pred_check_branch
      %2214 = sbr.rel (%p2212) target = $region52
    $region51: #{final_patch_expand_x4.1} parent=5 // pred_region
      %s2215 = ssub.s32 %s12, 2
      // Predicated region
      $region53: #{final_patch_expand_x4.1} parent=51 // pred_check
        %p2216 = pneg %p188
      $region54: #{final_patch_expand_x4.1} parent=51 // pred_check_branch
        %2218 = sbr.rel (%p2216) target = $region56
      $region55: #{final_patch_expand_x4.1} parent=51 // pred_region
        %s2219 = smul.u32 4, %s24
        %p2220 = scmp.lt.s32.totalorder %s23, 1
        %s2221 = scalar_select %p2220, %s23, 1
        %p2222 = scmp.lt.s32.totalorder %s2219, 3
        %s2223 = scalar_select %p2222, %s2219, 3
        %s2224 = smul.addr %s2223, 4
        %s2225 = smul.addr %s2221, 16
        %s2226 = sadd.s32 %s2224, %s2225
        %s2227 = smul.addr %s2226, 4
        %s2228 = scalar_lea.vmem %s6, %s2227
      $region56: #{final_patch_expand_x4.1} parent=51 // pred_fallthru
        _
    $region52: #{final_patch_expand_x4.1} parent=5 // pred_fallthru
      _
  $region6: #{final_patch_expand_x4.1} parent=0 // loop_footer
    %s16 = sadd.s32 1, %s12
  $region7: #{final_patch_expand_x4.1} parent=0 // loop_footer_branch
    %11 = sbr.rel target = $region3
  $region8: #{final_patch_expand_x4.1} parent=0 // loop_exit
    _

</llo_original>
